<compile_context>
chip_gen: v7x
topology: tpu7x:2x2x1
jax: 0.10.0
libtpu: 0.0.40
codegen_flags: <defaults>
</compile_context>

<pallas_src>
import functools

import jax
import jax.numpy as jnp
from jax.experimental import pallas as pl
from jax.experimental.pallas import tpu as pltpu


# ---------------------------------------------------------------------------
# Kernel
# ---------------------------------------------------------------------------
def _channel_attention_kernel(x_ref, w1_ref, b1_ref, w2_ref, b2_ref, o_ref,
                              sum_ref, max_ref, *, hw, t_hw):
    """Grid = (batch tiles [parallel], spatial tiles [arbitrary / reduction]).

    x_ref:  (TB, C, t_hw)      streamed spatial tile of the input
    w1_ref: (C, Ch)  b1_ref: (1, Ch)   shared MLP, layer 1   (resident)
    w2_ref: (Ch, C)  b2_ref: (1, C)    shared MLP, layer 2   (resident)
    o_ref:  (TB, 1, C)          sigmoid channel gate
    sum_ref/max_ref: (TB, C)    running-sum / running-max accumulators (f32)
    """
    hw_step = pl.program_id(1)
    n_hw = pl.num_programs(1)
    tb = o_ref.shape[0]

    # ---- init running accumulators at the first spatial tile --------------
    @pl.when(hw_step == 0)
    def _init():
        sum_ref[...] = jnp.zeros_like(sum_ref)
        max_ref[...] = jnp.full_like(max_ref, -jnp.inf)

    # ---- streaming reduction over this spatial tile -----------------------
    x = x_ref[...].astype(jnp.float32)                       # (TB, C, t_hw)

    def _accumulate(x_sum, x_max):
        sum_ref[...] = sum_ref[...] + jnp.sum(x_sum, axis=-1)              # (TB, C)
        max_ref[...] = jnp.maximum(max_ref[...], jnp.max(x_max, axis=-1))  # (TB, C)

    if hw % t_hw != 0:
        # Ragged spatial extent: only the LAST tile pays for the mask.
        is_last = hw_step == n_hw - 1

        @pl.when(jnp.logical_not(is_last))
        def _full_tile():
            _accumulate(x, x)

        @pl.when(is_last)
        def _ragged_tile():
            valid = hw - hw_step * t_hw                      # scalar
            lane = jax.lax.broadcasted_iota(jnp.int32, (1, 1, t_hw), 2)
            ok = lane < valid                                # (1, 1, t_hw) bool
            _accumulate(jnp.where(ok, x, 0.0), jnp.where(ok, x, -jnp.inf))
    else:
        _accumulate(x, x)

    # ---- finalize: shared MLP on both pooled vectors + sigmoid ------------
    @pl.when(hw_step == n_hw - 1)
    def _finalize():
        avg = sum_ref[...] * (1.0 / hw)                      # (TB, C)
        mx = max_ref[...]                                    # (TB, C)
        pooled = jnp.concatenate([avg, mx], axis=0)          # (2*TB, C): one MLP pass

        w1 = w1_ref[...].astype(jnp.float32)
        b1 = b1_ref[...].astype(jnp.float32)
        w2 = w2_ref[...].astype(jnp.float32)
        b2 = b2_ref[...].astype(jnp.float32)

        h = jnp.dot(pooled, w1, preferred_element_type=jnp.float32) + b1
        h = jnp.maximum(h, 0.0)                              # ReLU
        y = jnp.dot(h, w2, preferred_element_type=jnp.float32) + b2       # (2*TB, C)

        gate = jax.nn.sigmoid(y[:tb] + y[tb:]).astype(o_ref.dtype)        # (TB, C)
        # Per-row store avoids a (TB, C) -> (TB, 1, C) vreg relayout.
        for t in range(tb):
            o_ref[t, :, :] = gate[t:t + 1, :]


# ---------------------------------------------------------------------------
# Tiling helpers
# ---------------------------------------------------------------------------
def _detect_vmem_capacity_bytes():
    """Best-effort physical-VMEM query; conservative (v7x-sized) fallback."""
    try:
        info = pltpu.get_tpu_info()
        for name in ("vmem_capacity_bytes", "vmem_bytes"):
            cap = getattr(info, name, None)
            if cap is not None:
                cap = int(cap)
                if cap > 0:
                    return cap
    except Exception:
        pass
    return 64 << 20


def _pick_hw_tile(hw, c, itemsize, per_buffer_bytes):
    """Largest spatial tile (multiple of 128 lanes, or the full extent) that
    keeps one streamed (1-batch-row) x buffer under `per_buffer_bytes`."""
    if hw <= 128:
        return hw
    max_lanes = max(128, (per_buffer_bytes // (c * itemsize)) // 128 * 128)
    return hw if hw <= max_lanes else max_lanes


def _pick_batch_tile(b, bytes_per_row, per_buffer_bytes, prefer_two_steps):
    """Largest divisor of b whose x payload fits the buffer budget; on 2-TC
    chips keep at least two batch steps so both cores get parallel work."""
    best = 1
    for tb in range(1, b + 1):
        if b % tb:
            continue
        if tb > 1 and tb * bytes_per_row > per_buffer_bytes:
            continue
        if prefer_two_steps and b > 1 and b // tb < 2:
            continue
        best = tb
    return best


# ---------------------------------------------------------------------------
# Wrapper
# ---------------------------------------------------------------------------
def channel_attention(x, w1, b1, w2, b2, *, max_hw_tile=None, batch_tile=None):
    """x: (B, C, H, W) NCHW.  Returns (B, C, 1, 1) attention weights.

    Performance note: this kernel is bound by one HBM read of x, so the
    caller should provide x in bfloat16 where possible (in-kernel pooling
    accumulates in float32 regardless).  The wrapper intentionally does NOT
    cast: that would add a separate full HBM read+write pass over x.
    """
    B, C, H, W = x.shape
    HW = H * W
    hidden = w1.shape[1]
    x_flat = x.reshape(B, C, HW)
    itemsize = x_flat.dtype.itemsize

    # Chip-aware budgets: 128 MiB-VMEM chips (v5e/v6e, 1 TC) take bigger
    # streamed tiles; 64 MiB-VMEM chips (v7x-like, 2 TCs) stay conservative
    # and keep >=2 steps on the parallel batch axis.
    vmem_cap = _detect_vmem_capacity_bytes()
    big_vmem = vmem_cap >= (96 << 20)
    per_buffer = (8 << 20) if big_vmem else (4 << 20)

    t_hw = _pick_hw_tile(HW, C, itemsize, per_buffer)
    if max_hw_tile is not None and max_hw_tile < HW:
        t_hw = min(t_hw, max(128, (max_hw_tile // 128) * 128))
    n_hw = pl.cdiv(HW, t_hw)

    bytes_per_row = C * t_hw * itemsize
    if batch_tile is not None:
        TB = max(1, min(int(batch_tile), B))
        while B % TB:                      # keep B % TB == 0 (no ragged batch tail)
            TB -= 1
    else:
        TB = _pick_batch_tile(B, bytes_per_row, per_buffer,
                              prefer_two_steps=not big_vmem)

    kernel = functools.partial(_channel_attention_kernel, hw=HW, t_hw=t_hw)

    # VMEM budget: double-buffered x tiles + up to three full-tile f32
    # temporaries (cast x plus the masked sum/max operands on the ragged
    # tile) + resident params + headroom, clamped per chip generation.
    x_tile_bytes = TB * C * t_hw * itemsize
    f32_tile_bytes = TB * C * t_hw * 4
    param_bytes = sum(int(a.size) * a.dtype.itemsize for a in (w1, b1, w2, b2))
    vmem_limit = 2 * x_tile_bytes + 3 * f32_tile_bytes + 2 * param_bytes + (4 << 20)
    vmem_cap_limit = (96 << 20) if big_vmem else (48 << 20)
    vmem_limit = int(min(max(vmem_limit, 16 << 20), vmem_cap_limit))

    cost = pl.CostEstimate(
        flops=2 * B * C * HW + 8 * B * C * hidden,
        transcendentals=B * C,                       # sigmoid on (B, C)
        bytes_accessed=int(x_flat.size) * itemsize + param_bytes + B * C * itemsize,
    )

    out = pl.pallas_call(
        kernel,
        out_shape=jax.ShapeDtypeStruct((B, 1, C), x.dtype),
        grid_spec=pltpu.PrefetchScalarGridSpec(
            num_scalar_prefetch=0,
            grid=(B // TB, n_hw),
            in_specs=[
                pl.BlockSpec((TB, C, t_hw), lambda b, s: (b, 0, s)),   # streamed x
                pl.BlockSpec((C, hidden), lambda b, s: (0, 0)),        # resident W1
                pl.BlockSpec((1, hidden), lambda b, s: (0, 0)),        # resident b1
                pl.BlockSpec((hidden, C), lambda b, s: (0, 0)),        # resident W2
                pl.BlockSpec((1, C), lambda b, s: (0, 0)),             # resident b2
            ],
            out_specs=pl.BlockSpec((TB, 1, C), lambda b, s: (b, 0, 0)),
            scratch_shapes=[
                pltpu.VMEM((TB, C), jnp.float32),    # running sum
                pltpu.VMEM((TB, C), jnp.float32),    # running max
            ],
        ),
        compiler_params=pltpu.CompilerParams(
            dimension_semantics=("parallel", "arbitrary"),
            vmem_limit_bytes=vmem_limit,
        ),
        cost_estimate=cost,
    )(x_flat, w1, b1, w2, b2)

    return out.reshape(B, C, 1, 1)


# ---------------------------------------------------------------------------
# Params / reference
# ---------------------------------------------------------------------------
def init_params(key, in_channels, reduction_ratio=16, dtype=jnp.float32):
    """Deterministic init matching nn.Linear shapes.

    PyTorch Linear stores weight as (out, in); we store the transposed
    (in, out) form so the kernel can do y = x @ W + b directly.
    """
    hidden = in_channels // reduction_ratio
    k1, k2, k3, k4 = jax.random.split(key, 4)
    s1 = 1.0 / jnp.sqrt(in_channels)
    s2 = 1.0 / jnp.sqrt(hidden)
    w1 = jax.random.uniform(k1, (in_channels, hidden), dtype, -s1, s1)
    b1 = jax.random.uniform(k2, (1, hidden), dtype, -s1, s1)
    w2 = jax.random.uniform(k3, (hidden, in_channels), dtype, -s2, s2)
    b2 = jax.random.uniform(k4, (1, in_channels), dtype, -s2, s2)
    return w1, b1, w2, b2


def reference(x, w1, b1, w2, b2):
    """Pure-JAX reference with identical semantics to the PyTorch forward."""
    B, C, _, _ = x.shape
    avg = jnp.mean(x, axis=(2, 3))
    mx = jnp.max(x, axis=(2, 3))

    def mlp(v):
        return jnp.maximum(v @ w1 + b1, 0.0) @ w2 + b2

    return jax.nn.sigmoid(mlp(avg) + mlp(mx)).reshape(B, C, 1, 1)


if __name__ == "__main__":
    key = jax.random.PRNGKey(0)
    kx_root, kp = jax.random.split(key)

    C, R = 64, 16                       # in_channels=64, reduction=16 -> hidden=4
    w1, b1, w2, b2 = init_params(kp, C, reduction_ratio=R)

    # (B, H, W, dtype, max_hw_tile, batch_tile):
    #   0: multi spatial tile, evenly divisible (unmasked streaming path)
    #   1: ragged last spatial tile (masked path, gated to last tile)
    #   2: single spatial tile with TB=2 batch packing (finalize row stores)
    #   3: bf16 input (halved HBM traffic), automatic tiling
    configs = [
        (2, 16, 16, jnp.float32, 128, None),
        (2, 18, 18, jnp.float32, 128, None),
        (2, 16, 16, jnp.float32, None, 2),
        (2, 16, 16, jnp.bfloat16, None, None),
    ]
    for i, (B, H, W, dtype, max_tile, btile) in enumerate(configs):
        kx = jax.random.fold_in(kx_root, i)
        x = jax.random.normal(kx, (B, C, H, W), dtype=jnp.float32).astype(dtype)

        out = channel_attention(x, w1, b1, w2, b2,
                                max_hw_tile=max_tile, batch_tile=btile)
        out = jax.block_until_ready(out)

        ref = reference(x.astype(jnp.float32), w1, b1, w2, b2)
        tol = 1e-5 if dtype == jnp.float32 else 1e-2
        assert out.shape == (B, C, 1, 1)
        assert jnp.allclose(out.astype(jnp.float32), ref, atol=tol, rtol=tol), \
            f"mismatch in config {i}"

    print("KERNEL_OK")
</pallas_src>

<mosaic_0001>
module attributes {stable_mosaic.version = 11 : i64} {
  func.func @_channel_attention_kernel(%arg0: i32, %arg1: i32, %arg2: memref<1x64x128xf32, #tpu.memory_space<vmem>>, %arg3: memref<64x4xf32, #tpu.memory_space<vmem>>, %arg4: memref<1x4xf32, #tpu.memory_space<vmem>>, %arg5: memref<4x64xf32, #tpu.memory_space<vmem>>, %arg6: memref<1x64xf32, #tpu.memory_space<vmem>>, %arg7: memref<1x1x64xf32, #tpu.memory_space<vmem>>, %arg8: memref<1x64xf32, #tpu.memory_space<vmem>>, %arg9: memref<1x64xf32, #tpu.memory_space<vmem>>) attributes {dimension_semantics = [#tpu.dimension_semantics<parallel>, #tpu.dimension_semantics<arbitrary>], iteration_bounds = array<i64: 2, 2>, scalar_prefetch = 0 : i64, scratch_operands = 2 : i64, tpu.core_type = #tpu.core_type<tc>, window_params = [{transform_indices = @transform_0, window_bounds = array<i64: 1, 64, 128>}, {pipeline_mode = #tpu.pipeline_mode<synchronous>, transform_indices = @transform_1, window_bounds = array<i64: 64, 4>}, {pipeline_mode = #tpu.pipeline_mode<synchronous>, transform_indices = @transform_2, window_bounds = array<i64: 1, 4>}, {pipeline_mode = #tpu.pipeline_mode<synchronous>, transform_indices = @transform_3, window_bounds = array<i64: 4, 64>}, {pipeline_mode = #tpu.pipeline_mode<synchronous>, transform_indices = @transform_4, window_bounds = array<i64: 1, 64>}, {transform_indices = @transform_5, window_bounds = array<i64: 1, 1, 64>}]} {
    %c0_i32 = arith.constant 0 : i32
    %0 = arith.cmpi eq, %arg1, %c0_i32 : i32
    %1 = arith.extui %0 : i1 to i32
    %c0_i32_0 = arith.constant 0 : i32
    %2 = arith.cmpi ne, %1, %c0_i32_0 : i32
    scf.if %2 {
      %cst_13 = arith.constant 0.000000e+00 : f32
      %15 = vector.broadcast %cst_13 : f32 to vector<1x64xf32>
      %c0_14 = arith.constant 0 : index
      %c0_15 = arith.constant 0 : index
      %16 = vector.load %arg8[%c0_14, %c0_15] : memref<1x64xf32, #tpu.memory_space<vmem>>, vector<1x64xf32>
      tpu.vector_store %arg8[%c0_14, %c0_15], %15 {strides = array<i32>} : memref<1x64xf32, #tpu.memory_space<vmem>>, vector<1x64xf32>,
      %cst_16 = arith.constant 0xFF800000 : f32
      %17 = vector.broadcast %cst_16 : f32 to vector<1x64xf32>
      %c0_17 = arith.constant 0 : index
      %c0_18 = arith.constant 0 : index
      %18 = vector.load %arg9[%c0_17, %c0_18] : memref<1x64xf32, #tpu.memory_space<vmem>>, vector<1x64xf32>
      tpu.vector_store %arg9[%c0_17, %c0_18], %17 {strides = array<i32>} : memref<1x64xf32, #tpu.memory_space<vmem>>, vector<1x64xf32>,
    } else {
    }
    %c0 = arith.constant 0 : index
    %c0_1 = arith.constant 0 : index
    %c0_2 = arith.constant 0 : index
    %3 = vector.load %arg2[%c0, %c0_1, %c0_2] : memref<1x64x128xf32, #tpu.memory_space<vmem>>, vector<1x64x128xf32>
    %c0_3 = arith.constant 0 : index
    %c0_4 = arith.constant 0 : index
    %4 = vector.load %arg8[%c0_3, %c0_4] : memref<1x64xf32, #tpu.memory_space<vmem>>, vector<1x64xf32>
    %cst = arith.constant dense<0.000000e+00> : vector<1x64xf32>
    %5 = vector.multi_reduction <add>, %3, %cst [2] : vector<1x64x128xf32> to vector<1x64xf32>
    %6 = arith.addf %4, %5 : vector<1x64xf32>
    %c0_5 = arith.constant 0 : index
    %c0_6 = arith.constant 0 : index
    %7 = vector.load %arg8[%c0_5, %c0_6] : memref<1x64xf32, #tpu.memory_space<vmem>>, vector<1x64xf32>
    tpu.vector_store %arg8[%c0_5, %c0_6], %6 {strides = array<i32>} : memref<1x64xf32, #tpu.memory_space<vmem>>, vector<1x64xf32>,
    %c0_7 = arith.constant 0 : index
    %c0_8 = arith.constant 0 : index
    %8 = vector.load %arg9[%c0_7, %c0_8] : memref<1x64xf32, #tpu.memory_space<vmem>>, vector<1x64xf32>
    %cst_9 = arith.constant dense<0xFF800000> : vector<1x64xf32>
    %9 = vector.multi_reduction <maximumf>, %3, %cst_9 [2] : vector<1x64x128xf32> to vector<1x64xf32>
    %10 = arith.maximumf %8, %9 : vector<1x64xf32>
    %c0_10 = arith.constant 0 : index
    %c0_11 = arith.constant 0 : index
    %11 = vector.load %arg9[%c0_10, %c0_11] : memref<1x64xf32, #tpu.memory_space<vmem>>, vector<1x64xf32>
    tpu.vector_store %arg9[%c0_10, %c0_11], %10 {strides = array<i32>} : memref<1x64xf32, #tpu.memory_space<vmem>>, vector<1x64xf32>,
    %c1_i32 = arith.constant 1 : i32
    %12 = arith.cmpi eq, %arg1, %c1_i32 : i32
    %13 = arith.extui %12 : i1 to i32
    %c0_i32_12 = arith.constant 0 : i32
    %14 = arith.cmpi ne, %13, %c0_i32_12 : i32
    scf.if %14 {
      %c0_13 = arith.constant 0 : index
      %c0_14 = arith.constant 0 : index
      %15 = vector.load %arg8[%c0_13, %c0_14] : memref<1x64xf32, #tpu.memory_space<vmem>>, vector<1x64xf32>
      %cst_15 = arith.constant 3.906250e-03 : f32
      %16 = vector.broadcast %cst_15 : f32 to vector<1x64xf32>
      %17 = arith.mulf %15, %16 : vector<1x64xf32>
      %c0_16 = arith.constant 0 : index
      %c0_17 = arith.constant 0 : index
      %18 = vector.load %arg9[%c0_16, %c0_17] : memref<1x64xf32, #tpu.memory_space<vmem>>, vector<1x64xf32>
      %19 = tpu.concatenate %17, %18 in 0 : vector<1x64xf32>, vector<1x64xf32> -> vector<2x64xf32>
      %c0_18 = arith.constant 0 : index
      %c0_19 = arith.constant 0 : index
      %20 = vector.load %arg3[%c0_18, %c0_19] : memref<64x4xf32, #tpu.memory_space<vmem>>, vector<64x4xf32>
      %c0_20 = arith.constant 0 : index
      %c0_21 = arith.constant 0 : index
      %21 = vector.load %arg4[%c0_20, %c0_21] : memref<1x4xf32, #tpu.memory_space<vmem>>, vector<1x4xf32>
      %c0_22 = arith.constant 0 : index
      %c0_23 = arith.constant 0 : index
      %22 = vector.load %arg5[%c0_22, %c0_23] : memref<4x64xf32, #tpu.memory_space<vmem>>, vector<4x64xf32>
      %c0_24 = arith.constant 0 : index
      %c0_25 = arith.constant 0 : index
      %23 = vector.load %arg6[%c0_24, %c0_25] : memref<1x64xf32, #tpu.memory_space<vmem>>, vector<1x64xf32>
      %cst_26 = arith.constant dense<0.000000e+00> : vector<2x4xf32>
      %24 = tpu.matmul %19, %20, %cst_26 {dimension_numbers = #tpu.dot_dimension_numbers<[1], [0], [0], [1], [0, 0, 1, 1], [], []>} : vector<2x64xf32>, vector<64x4xf32>, vector<2x4xf32> -> vector<2x4xf32>
      %25 = vector.broadcast %21 : vector<1x4xf32> to vector<2x4xf32>
      %26 = arith.addf %24, %25 : vector<2x4xf32>
      %cst_27 = arith.constant 0.000000e+00 : f32
      %27 = vector.broadcast %cst_27 : f32 to vector<2x4xf32>
      %28 = arith.maximumf %26, %27 : vector<2x4xf32>
      %cst_28 = arith.constant dense<0.000000e+00> : vector<2x64xf32>
      %29 = tpu.matmul %28, %22, %cst_28 {dimension_numbers = #tpu.dot_dimension_numbers<[1], [0], [0], [1], [0, 0, 1, 1], [], []>} : vector<2x4xf32>, vector<4x64xf32>, vector<2x64xf32> -> vector<2x64xf32>
      %30 = vector.broadcast %23 : vector<1x64xf32> to vector<2x64xf32>
      %31 = arith.addf %29, %30 : vector<2x64xf32>
      %32 = vector.extract_strided_slice %31 {offsets = [0, 0], sizes = [1, 64], strides = [1, 1]} : vector<2x64xf32> to vector<1x64xf32>
      %33 = vector.extract_strided_slice %31 {offsets = [1, 0], sizes = [1, 64], strides = [1, 1]} : vector<2x64xf32> to vector<1x64xf32>
      %34 = arith.addf %32, %33 : vector<1x64xf32>
      %35 = arith.negf %34 : vector<1x64xf32>
      %36 = math.exp %35 : vector<1x64xf32>
      %cst_29 = arith.constant 1.000000e+00 : f32
      %37 = vector.broadcast %cst_29 : f32 to vector<1x64xf32>
      %38 = arith.addf %37, %36 : vector<1x64xf32>
      %39 = arith.divf %37, %38 : vector<1x64xf32>
      %c0_30 = arith.constant 0 : index
      %c0_31 = arith.constant 0 : index
      %c0_32 = arith.constant 0 : index
      %40 = vector.load %arg7[%c0_30, %c0_31, %c0_32] : memref<1x1x64xf32, #tpu.memory_space<vmem>>, vector<1x1x64xf32>
      %41 = vector.shape_cast %40 : vector<1x1x64xf32> to vector<1x64xf32>
      %42 = vector.shape_cast %39 : vector<1x64xf32> to vector<1x1x64xf32>
      tpu.vector_store %arg7[%c0_30, %c0_31, %c0_32], %42 {strides = array<i32>} : memref<1x1x64xf32, #tpu.memory_space<vmem>>, vector<1x1x64xf32>,
    } else {
    }
    return
  }
  func.func @transform_0(%arg0: i32, %arg1: i32) -> (i32, i32, i32) {
    %c0_i32 = arith.constant 0 : i32
    %c0_i32_0 = arith.constant 0 : i32
    return %arg0, %c0_i32, %arg1 : i32, i32, i32
  }
  func.func @transform_1(%arg0: i32, %arg1: i32) -> (i32, i32) {
    %c0_i32 = arith.constant 0 : i32
    %c0_i32_0 = arith.constant 0 : i32
    %c0_i32_1 = arith.constant 0 : i32
    return %c0_i32, %c0_i32_0 : i32, i32
  }
  func.func @transform_2(%arg0: i32, %arg1: i32) -> (i32, i32) {
    %c0_i32 = arith.constant 0 : i32
    %c0_i32_0 = arith.constant 0 : i32
    %c0_i32_1 = arith.constant 0 : i32
    return %c0_i32, %c0_i32_0 : i32, i32
  }
  func.func @transform_3(%arg0: i32, %arg1: i32) -> (i32, i32) {
    %c0_i32 = arith.constant 0 : i32
    %c0_i32_0 = arith.constant 0 : i32
    %c0_i32_1 = arith.constant 0 : i32
    return %c0_i32, %c0_i32_0 : i32, i32
  }
  func.func @transform_4(%arg0: i32, %arg1: i32) -> (i32, i32) {
    %c0_i32 = arith.constant 0 : i32
    %c0_i32_0 = arith.constant 0 : i32
    %c0_i32_1 = arith.constant 0 : i32
    return %c0_i32, %c0_i32_0 : i32, i32
  }
  func.func @transform_5(%arg0: i32, %arg1: i32) -> (i32, i32, i32) {
    %c0_i32 = arith.constant 0 : i32
    %c0_i32_0 = arith.constant 0 : i32
    %c0_i32_1 = arith.constant 0 : i32
    return %arg0, %c0_i32, %c0_i32_0 : i32, i32, i32
  }
}

</mosaic_0001>

<llo_original>
// kernel: tpu_custom_call.1
$region0: #{tpu_custom_call.1}
  #allocation0 [shape = 'u32[]', space=smem, size = 0x4, offset = 0x4, fixed_abs, tag = 'smem constant byte address 0x4 - core index']
  #allocation1 [shape = 'u32[144,128]{1,0:T(1,128)}', space=vmem, size = 0x12000, scoped, tag = 'internal scratch']
  #allocation2 [shape = 'f32[1,64]{1,0:T(1,128)}', space=vmem, size = 0x200, scoped, tag = 'scratch operand']
  #allocation3 [shape = 'f32[1,64]{1,0:T(1,128)}', space=vmem, size = 0x200, scoped, tag = 'scratch operand']
  %s0 = inlined_call_operand.hbm [shape: f32[2,64,256], index: 0, kind: input, shape index: {}]
  %s1 = inlined_call_operand.vmem [shape: f32[64,4], index: 1, kind: input, shape index: {}]
  %s2 = inlined_call_operand.vmem [shape: f32[1,4], index: 2, kind: input, shape index: {}]
  %s3 = inlined_call_operand.vmem [shape: f32[4,64], index: 3, kind: input, shape index: {}]
  %s4 = inlined_call_operand.vmem [shape: f32[1,64], index: 4, kind: input, shape index: {}]
  %s5 = inlined_call_operand.hbm [shape: f32[2,1,64], index: 5, kind: output, shape index: {}]
  %s6 = sld [smem:[#allocation0]]
  $region65: #{tpu_custom_call.1} parent=0
    _
  %s8 = ssub.s32 1, %s6
  %s9 = scalar_select 0, %s8, %s6
  $region1: #{tpu_custom_call.1} parent=0
    #allocation4 [shape = 'u8[65536]{0}', space=vmem, size = 0x10000, scoped, tag = 'input window, operand 0']
    #allocation5 [shape = 's32[2]{0}', space=sflag, size = 0x8, scoped, tag = 'scoped memory for tpu_custom_call.1']
    #allocation6 [shape = 's32[2]{0}', space=sflag, size = 0x8, scoped, tag = 'scoped memory for tpu_custom_call.1']
    #allocation7 [shape = 'u8[1024]{0}', space=vmem, size = 0x400, scoped, tag = 'output window, operand 0']
    %10 = vsyncpa [#allocation5], 0
    %s11 = scalar_lea.sflag [#allocation5], 1
    %12 = vsyncpa %s11, 0
    %13 = vsyncpa [#allocation6], 0
    %s14 = scalar_lea.sflag [#allocation6], 1
    %15 = vsyncpa %s14, 0
    loop: start=0, step=1, limit=6
    $region2: #{tpu_custom_call.1} parent=1 // loop_pre_header
      _
    $region3: #{tpu_custom_call.1} parent=1 // loop_header
      %s17 = sphi 0, %s21
      %p18 = scmp.ge.s32.totalorder %s17, 6
      %s24 = sphi 0, %s36
      %s25 = sphi 0, %s32
      %s26 = sphi 0, %s24
      %s27 = sphi 0, %s25
      %s28 = sphi 0, %s26
      %s29 = sphi 0, %s27
      %s41 = sphi 0, %s43
      %s44 = sphi 0, %s41
      %s45 = sphi 0, %s44
      %s61 = sphi 0, %s45
      %s65 = sphi 0, %s65
      %s67 = sphi 0, %s65
      %s68 = sphi 0, %s67
      %s82 = sphi 0, %s68
      %s86 = sphi 0, %s86
      %s88 = sphi 0, %s86
      %s89 = sphi 0, %s88
      %s103 = sphi 0, %s89
      %s107 = sphi 0, %s107
      %s109 = sphi 0, %s107
      %s110 = sphi 0, %s109
      %s124 = sphi 0, %s110
      %s128 = sphi 0, %s128
      %s130 = sphi 0, %s128
      %s131 = sphi 0, %s130
      %s145 = sphi 0, %s131
      %s151 = sphi 0, %s153
      %s154 = sphi 0, %s151
      %s155 = sphi 0, %s154
      %s171 = sphi 0, %s155
    $region4: #{tpu_custom_call.1} parent=1 // loop_header_branch
      %20 = sbr.rel (%p18) target = $region8
    $region5: #{tpu_custom_call.1} parent=1 // loop_body
      %s22 = ssub.s32 %s17, 1
      %s23 = ssub.s32 %s17, 2
      %s30 = sadd.s32 1, %s25
      %p31 = scmp.ge.s32.totalorder %s30, 2
      %s32 = scalar_select %p31, 0, %s30
      %s33 = sadd.s32 1, %s24
      %s34 = scalar_select %p31, %s33, %s24
      %p35 = scmp.ge.s32.totalorder %s34, 2
      %s36 = scalar_select %p35, 0, %s34
      %s37 = ssub.s32 %s24, %s36
      %s38 = ssub.s32 %s25, %s32
      %s39 = sor.u32 %s37, %s38
      %p40 = scmp.eq.s32.totalorder %s39, 0
      %s42 = sadd.s32 %s41, 1
      %s43 = scalar_select %p40, %s41, %s42
      %p46 = pneg %p40
      %p47 = scmp.eq.s32.totalorder %s17, 3
      %p48 = por %p46, %p47
      %p49 = scmp.ne.s32.totalorder %s41, %s44
      %p50 = scmp.eq.s32.totalorder %s17, 0
      %p51 = por %p49, %p50
      %p52 = scmp.ne.s32.totalorder %s41, %s44
      %p53 = scmp.eq.s32.totalorder %s22, 3
      %p54 = por %p52, %p53
      %p55 = scmp.ne.s32.totalorder %s44, %s45
      %p56 = scmp.eq.s32.totalorder %s22, 0
      %p57 = por %p55, %p56
      %p58 = scmp.ne.s32.totalorder %s44, %s45
      %p59 = scmp.eq.s32.totalorder %s23, 3
      %p60 = por %p58, %p59
      %p62 = scmp.ne.s32.totalorder %s45, %s61
      %p63 = scmp.eq.s32.totalorder %s23, 0
      %p64 = por %p62, %p63
      %s66 = sadd.s32 %s65, 1
      %p69 = scmp.eq.s32.totalorder %s17, 3
      %p70 = scmp.ne.s32.totalorder %s65, %s67
      %p71 = scmp.eq.s32.totalorder %s17, 0
      %p72 = por %p70, %p71
      %p73 = scmp.ne.s32.totalorder %s65, %s67
      %p74 = scmp.eq.s32.totalorder %s22, 3
      %p75 = por %p73, %p74
      %p76 = scmp.ne.s32.totalorder %s67, %s68
      %p77 = scmp.eq.s32.totalorder %s22, 0
      %p78 = por %p76, %p77
      %p79 = scmp.ne.s32.totalorder %s67, %s68
      %p80 = scmp.eq.s32.totalorder %s23, 3
      %p81 = por %p79, %p80
      %p83 = scmp.ne.s32.totalorder %s68, %s82
      %p84 = scmp.eq.s32.totalorder %s23, 0
      %p85 = por %p83, %p84
      %s87 = sadd.s32 %s86, 1
      %p90 = scmp.eq.s32.totalorder %s17, 3
      %p91 = scmp.ne.s32.totalorder %s86, %s88
      %p92 = scmp.eq.s32.totalorder %s17, 0
      %p93 = por %p91, %p92
      %p94 = scmp.ne.s32.totalorder %s86, %s88
      %p95 = scmp.eq.s32.totalorder %s22, 3
      %p96 = por %p94, %p95
      %p97 = scmp.ne.s32.totalorder %s88, %s89
      %p98 = scmp.eq.s32.totalorder %s22, 0
      %p99 = por %p97, %p98
      %p100 = scmp.ne.s32.totalorder %s88, %s89
      %p101 = scmp.eq.s32.totalorder %s23, 3
      %p102 = por %p100, %p101
      %p104 = scmp.ne.s32.totalorder %s89, %s103
      %p105 = scmp.eq.s32.totalorder %s23, 0
      %p106 = por %p104, %p105
      %s108 = sadd.s32 %s107, 1
      %p111 = scmp.eq.s32.totalorder %s17, 3
      %p112 = scmp.ne.s32.totalorder %s107, %s109
      %p113 = scmp.eq.s32.totalorder %s17, 0
      %p114 = por %p112, %p113
      %p115 = scmp.ne.s32.totalorder %s107, %s109
      %p116 = scmp.eq.s32.totalorder %s22, 3
      %p117 = por %p115, %p116
      %p118 = scmp.ne.s32.totalorder %s109, %s110
      %p119 = scmp.eq.s32.totalorder %s22, 0
      %p120 = por %p118, %p119
      %p121 = scmp.ne.s32.totalorder %s109, %s110
      %p122 = scmp.eq.s32.totalorder %s23, 3
      %p123 = por %p121, %p122
      %p125 = scmp.ne.s32.totalorder %s110, %s124
      %p126 = scmp.eq.s32.totalorder %s23, 0
      %p127 = por %p125, %p126
      %s129 = sadd.s32 %s128, 1
      %p132 = scmp.eq.s32.totalorder %s17, 3
      %p133 = scmp.ne.s32.totalorder %s128, %s130
      %p134 = scmp.eq.s32.totalorder %s17, 0
      %p135 = por %p133, %p134
      %p136 = scmp.ne.s32.totalorder %s128, %s130
      %p137 = scmp.eq.s32.totalorder %s22, 3
      %p138 = por %p136, %p137
      %p139 = scmp.ne.s32.totalorder %s130, %s131
      %p140 = scmp.eq.s32.totalorder %s22, 0
      %p141 = por %p139, %p140
      %p142 = scmp.ne.s32.totalorder %s130, %s131
      %p143 = scmp.eq.s32.totalorder %s23, 3
      %p144 = por %p142, %p143
      %p146 = scmp.ne.s32.totalorder %s131, %s145
      %p147 = scmp.eq.s32.totalorder %s23, 0
      %p148 = por %p146, %p147
      %s149 = ssub.s32 %s24, %s36
      %p150 = scmp.eq.s32.totalorder %s149, 0
      %s152 = sadd.s32 %s151, 1
      %s153 = scalar_select %p150, %s151, %s152
      %p156 = pneg %p150
      %p157 = scmp.eq.s32.totalorder %s17, 3
      %p158 = por %p156, %p157
      %p159 = scmp.ne.s32.totalorder %s151, %s154
      %p160 = scmp.eq.s32.totalorder %s17, 0
      %p161 = por %p159, %p160
      %p162 = scmp.ne.s32.totalorder %s151, %s154
      %p163 = scmp.eq.s32.totalorder %s22, 3
      %p164 = por %p162, %p163
      %p165 = scmp.ne.s32.totalorder %s154, %s155
      %p166 = scmp.eq.s32.totalorder %s22, 0
      %p167 = por %p165, %p166
      %p168 = scmp.ne.s32.totalorder %s154, %s155
      %p169 = scmp.eq.s32.totalorder %s23, 3
      %p170 = por %p168, %p169
      %p172 = scmp.ne.s32.totalorder %s155, %s171
      %p173 = scmp.eq.s32.totalorder %s23, 0
      %p174 = por %p172, %p173
      %p175 = scmp.le.s32.totalorder 1, %s17
      %p176 = scmp.lt.s32.totalorder %s17, 5
      %p177 = pnand %p175, %p176
      %p178 = pneg %p177
      // Predicated region
      $region9: #{tpu_custom_call.1} parent=5 // pred_check
        _
      $region10: #{tpu_custom_call.1} parent=5 // pred_check_branch
        %180 = sbr.rel (%p177) target = $region12
      $region11: #{tpu_custom_call.1} parent=5 // pred_region
        %s181 = ssub.s32 %s17, 1
        // Predicated region
        $region13: #{tpu_custom_call.1} parent=11 // pred_check
          %p182 = pneg %p78
        $region14: #{tpu_custom_call.1} parent=11 // pred_check_branch
          %184 = sbr.rel (%p182) target = $region16
        $region15: #{tpu_custom_call.1} parent=11 // pred_region
          _
        $region16: #{tpu_custom_call.1} parent=11 // pred_fallthru
          _
        // Predicated region
        $region17: #{tpu_custom_call.1} parent=11 // pred_check
          %p185 = pneg %p99
        $region18: #{tpu_custom_call.1} parent=11 // pred_check_branch
          %187 = sbr.rel (%p185) target = $region20
        $region19: #{tpu_custom_call.1} parent=11 // pred_region
          _
        $region20: #{tpu_custom_call.1} parent=11 // pred_fallthru
          _
        // Predicated region
        $region21: #{tpu_custom_call.1} parent=11 // pred_check
          %p188 = pneg %p120
        $region22: #{tpu_custom_call.1} parent=11 // pred_check_branch
          %190 = sbr.rel (%p188) target = $region24
        $region23: #{tpu_custom_call.1} parent=11 // pred_region
          _
        $region24: #{tpu_custom_call.1} parent=11 // pred_fallthru
          _
        // Predicated region
        $region25: #{tpu_custom_call.1} parent=11 // pred_check
          %p191 = pneg %p141
        $region26: #{tpu_custom_call.1} parent=11 // pred_check_branch
          %193 = sbr.rel (%p191) target = $region28
        $region27: #{tpu_custom_call.1} parent=11 // pred_region
          _
        $region28: #{tpu_custom_call.1} parent=11 // pred_fallthru
          _
      $region12: #{tpu_custom_call.1} parent=5 // pred_fallthru
        _
      %p194 = scmp.lt.s32.totalorder %s17, 4
      // Predicated region
      $region29: #{tpu_custom_call.1} parent=5 // pred_check
        %p195 = pneg %p194
      $region30: #{tpu_custom_call.1} parent=5 // pred_check_branch
        %197 = sbr.rel (%p195) target = $region32
      $region31: #{tpu_custom_call.1} parent=5 // pred_region
        // Predicated region
        $region33: #{tpu_custom_call.1} parent=31 // pred_check
          %p198 = pneg %p51
        $region34: #{tpu_custom_call.1} parent=31 // pred_check_branch
          %200 = sbr.rel (%p198) target = $region36
        $region35: #{tpu_custom_call.1} parent=31 // pred_region
          %s201 = sand.u32 %s41, 1
          %s202 = scalar_lea.sflag [#allocation5], %s201
          %s203 = sand.u32 %s41, 1
          %s204 = smul.addr %s203, 64
          %s205 = scalar_lea.vmem [#allocation4], %s204
          %s207 = ssub.s32 1024, 1024
          %208 = vsyncadd %s202, %s207
          %s209 = smul.addr %s24, 16
          %s210 = sadd.s32 %s25, %s209
          %s211 = smul.addr %s210, 128
          %s212 = scalar_lea.hbm %s0, %s211
          %s213 = sshll.u32 %s205, 4
          %s214 = int_to_ptr.vmem [resolvable:$true] %s213
          %219 = dma.hbm_to_vmem [thread:$0]  %s212, 1024, %s214, %s202, 256, 128, 8
        $region36: #{tpu_custom_call.1} parent=31 // pred_fallthru
          _
      $region32: #{tpu_custom_call.1} parent=5 // pred_fallthru
        _
      %p220 = scmp.le.s32.totalorder 1, %s17
      %p221 = scmp.lt.s32.totalorder %s17, 5
      %p222 = pnand %p220, %p221
      %p223 = pneg %p222
      // Predicated region
      $region37: #{tpu_custom_call.1} parent=5 // pred_check
        _
      $region38: #{tpu_custom_call.1} parent=5 // pred_check_branch
        %225 = sbr.rel (%p222) target = $region40
      $region39: #{tpu_custom_call.1} parent=5 // pred_region
        %s226 = ssub.s32 %s17, 1
        %s227 = sand.u32 %s44, 1
        %s228 = scalar_lea.sflag [#allocation5], %s227
        %s229 = sand.u32 %s44, 1
        %s230 = smul.addr %s229, 64
        %s231 = scalar_lea.vmem [#allocation4], %s230
        // Predicated region
        $region41: #{tpu_custom_call.1} parent=39 // pred_check
          %p232 = pneg %p57
        $region42: #{tpu_custom_call.1} parent=39 // pred_check_branch
          %234 = sbr.rel (%p232) target = $region44
        $region43: #{tpu_custom_call.1} parent=39 // pred_region
          %235 = dma.done %s228, 1024
        $region44: #{tpu_custom_call.1} parent=39 // pred_fallthru
          _
        %s236 = sand.u32 %s44, 1
        %s237 = scalar_lea.sflag [#allocation5], %s236
        %s238 = sand.u32 %s44, 1
        %s239 = smul.addr %s238, 64
        %s240 = scalar_lea.vmem [#allocation4], %s239
        %p241 = pneg %p57
        %p242 = pneg %p54
        %p243 = pneg %p78
        %p244 = pneg %p75
        %p245 = pneg %p99
        %p246 = pneg %p96
        %p247 = pneg %p120
        %p248 = pneg %p117
        %p249 = pneg %p141
        %p250 = pneg %p138
        %p251 = pneg %p167
        %p252 = pneg %p164
        %s253 = sand.u32 %s154, 1
        %s254 = scalar_lea.sflag [#allocation6], %s253
        %s255 = sand.u32 %s154, 1
        %s256 = scalar_lea.vmem [#allocation7], %s255
        %p257 = scmp.eq.s32.totalorder %s27, 0
        // Predicated region
        $region45: #{tpu_custom_call.1} parent=39 // pred_check
          %p258 = pneg %p257
        $region46: #{tpu_custom_call.1} parent=39 // pred_check_branch
          %260 = sbr.rel (%p258) target = $region48
        $region47: #{tpu_custom_call.1} parent=39 // pred_region
          %vm261 = vcmask 516096
          %262 = vst.msk [vmem:[#allocation2] sm:$0x1] %vm261, 0.0
          %263 = vst.msk [vmem:[#allocation3] sm:$0x1] %vm261, -inf
        $region48: #{tpu_custom_call.1} parent=39 // pred_fallthru
          _
        %v264 = vld [vmem:[%s231] sm:$0xff]
        %v265 = vld [vmem:[%s231 + $0x8] sm:$0xff]
        %v266 = vld [vmem:[%s231 + $0x10] sm:$0xff]
        %v267 = vld [vmem:[%s231 + $0x18] sm:$0xff]
        %v268 = vld [vmem:[%s231 + $0x20] sm:$0xff]
        %v269 = vld [vmem:[%s231 + $0x28] sm:$0xff]
        %v270 = vld [vmem:[%s231 + $0x30] sm:$0xff]
        %v271 = vld [vmem:[%s231 + $0x38] sm:$0xff]
        %v272 = vld [vmem:[#allocation2] sm:$0x1]
        %273 = vadd.xlane.f32.xlu0 %v264
        %v274 = vpop.xlane.xlu0 %273
        %275 = vadd.xlane.f32.xlu0 %v265
        %v276 = vpop.xlane.xlu0 %275
        %277 = vadd.xlane.f32.xlu0 %v266
        %v278 = vpop.xlane.xlu0 %277
        %279 = vadd.xlane.f32.xlu0 %v267
        %v280 = vpop.xlane.xlu0 %279
        %281 = vadd.xlane.f32.xlu0 %v268
        %v282 = vpop.xlane.xlu0 %281
        %283 = vadd.xlane.f32.xlu0 %v269
        %v284 = vpop.xlane.xlu0 %283
        %285 = vadd.xlane.f32.xlu0 %v270
        %v286 = vpop.xlane.xlu0 %285
        %287 = vadd.xlane.f32.xlu0 %v271
        %v288 = vpop.xlane.xlu0 %287
        %v297 = vlaneseq
        %v298 = vshrl.u32 %v297, 7
        %v299 = vsub.s32 0, %v298
        %v300 = vrot.slane %v274, %v299
        %v301 = vlaneseq
        %v302 = vshrl.u32 %v301, 7
        %v303 = vsub.s32 1, %v302
        %v304 = vrot.slane %v274, %v303
        %v305 = vlaneseq
        %v306 = vshrl.u32 %v305, 7
        %v307 = vsub.s32 2, %v306
        %v308 = vrot.slane %v274, %v307
        %v309 = vlaneseq
        %v310 = vshrl.u32 %v309, 7
        %v311 = vsub.s32 3, %v310
        %v312 = vrot.slane %v274, %v311
        %v313 = vlaneseq
        %v314 = vshrl.u32 %v313, 7
        %v315 = vsub.s32 4, %v314
        %v316 = vrot.slane %v274, %v315
        %v317 = vlaneseq
        %v318 = vshrl.u32 %v317, 7
        %v319 = vsub.s32 5, %v318
        %v320 = vrot.slane %v274, %v319
        %v321 = vlaneseq
        %v322 = vshrl.u32 %v321, 7
        %v323 = vsub.s32 6, %v322
        %v324 = vrot.slane %v274, %v323
        %v325 = vlaneseq
        %v326 = vshrl.u32 %v325, 7
        %v327 = vsub.s32 7, %v326
        %v328 = vrot.slane %v274, %v327
        %v329 = vlaneseq
        %v330 = vshrl.u32 %v329, 7
        %v331 = vsub.s32 0, %v330
        %v332 = vrot.slane %v276, %v331
        %v333 = vlaneseq
        %v334 = vshrl.u32 %v333, 7
        %v335 = vsub.s32 1, %v334
        %v336 = vrot.slane %v276, %v335
        %v337 = vlaneseq
        %v338 = vshrl.u32 %v337, 7
        %v339 = vsub.s32 2, %v338
        %v340 = vrot.slane %v276, %v339
        %v341 = vlaneseq
        %v342 = vshrl.u32 %v341, 7
        %v343 = vsub.s32 3, %v342
        %v344 = vrot.slane %v276, %v343
        %v345 = vlaneseq
        %v346 = vshrl.u32 %v345, 7
        %v347 = vsub.s32 4, %v346
        %v348 = vrot.slane %v276, %v347
        %v349 = vlaneseq
        %v350 = vshrl.u32 %v349, 7
        %v351 = vsub.s32 5, %v350
        %v352 = vrot.slane %v276, %v351
        %v353 = vlaneseq
        %v354 = vshrl.u32 %v353, 7
        %v355 = vsub.s32 6, %v354
        %v356 = vrot.slane %v276, %v355
        %v357 = vlaneseq
        %v358 = vshrl.u32 %v357, 7
        %v359 = vsub.s32 7, %v358
        %v360 = vrot.slane %v276, %v359
        %v361 = vlaneseq
        %v362 = vshrl.u32 %v361, 7
        %v363 = vsub.s32 0, %v362
        %v364 = vrot.slane %v278, %v363
        %v365 = vlaneseq
        %v366 = vshrl.u32 %v365, 7
        %v367 = vsub.s32 1, %v366
        %v368 = vrot.slane %v278, %v367
        %v369 = vlaneseq
        %v370 = vshrl.u32 %v369, 7
        %v371 = vsub.s32 2, %v370
        %v372 = vrot.slane %v278, %v371
        %v373 = vlaneseq
        %v374 = vshrl.u32 %v373, 7
        %v375 = vsub.s32 3, %v374
        %v376 = vrot.slane %v278, %v375
        %v377 = vlaneseq
        %v378 = vshrl.u32 %v377, 7
        %v379 = vsub.s32 4, %v378
        %v380 = vrot.slane %v278, %v379
        %v381 = vlaneseq
        %v382 = vshrl.u32 %v381, 7
        %v383 = vsub.s32 5, %v382
        %v384 = vrot.slane %v278, %v383
        %v385 = vlaneseq
        %v386 = vshrl.u32 %v385, 7
        %v387 = vsub.s32 6, %v386
        %v388 = vrot.slane %v278, %v387
        %v389 = vlaneseq
        %v390 = vshrl.u32 %v389, 7
        %v391 = vsub.s32 7, %v390
        %v392 = vrot.slane %v278, %v391
        %v393 = vlaneseq
        %v394 = vshrl.u32 %v393, 7
        %v395 = vsub.s32 0, %v394
        %v396 = vrot.slane %v280, %v395
        %v397 = vlaneseq
        %v398 = vshrl.u32 %v397, 7
        %v399 = vsub.s32 1, %v398
        %v400 = vrot.slane %v280, %v399
        %v401 = vlaneseq
        %v402 = vshrl.u32 %v401, 7
        %v403 = vsub.s32 2, %v402
        %v404 = vrot.slane %v280, %v403
        %v405 = vlaneseq
        %v406 = vshrl.u32 %v405, 7
        %v407 = vsub.s32 3, %v406
        %v408 = vrot.slane %v280, %v407
        %v409 = vlaneseq
        %v410 = vshrl.u32 %v409, 7
        %v411 = vsub.s32 4, %v410
        %v412 = vrot.slane %v280, %v411
        %v413 = vlaneseq
        %v414 = vshrl.u32 %v413, 7
        %v415 = vsub.s32 5, %v414
        %v416 = vrot.slane %v280, %v415
        %v417 = vlaneseq
        %v418 = vshrl.u32 %v417, 7
        %v419 = vsub.s32 6, %v418
        %v420 = vrot.slane %v280, %v419
        %v421 = vlaneseq
        %v422 = vshrl.u32 %v421, 7
        %v423 = vsub.s32 7, %v422
        %v424 = vrot.slane %v280, %v423
        %v425 = vlaneseq
        %v426 = vshrl.u32 %v425, 7
        %v427 = vsub.s32 0, %v426
        %v428 = vrot.slane %v282, %v427
        %v429 = vlaneseq
        %v430 = vshrl.u32 %v429, 7
        %v431 = vsub.s32 1, %v430
        %v432 = vrot.slane %v282, %v431
        %v433 = vlaneseq
        %v434 = vshrl.u32 %v433, 7
        %v435 = vsub.s32 2, %v434
        %v436 = vrot.slane %v282, %v435
        %v437 = vlaneseq
        %v438 = vshrl.u32 %v437, 7
        %v439 = vsub.s32 3, %v438
        %v440 = vrot.slane %v282, %v439
        %v441 = vlaneseq
        %v442 = vshrl.u32 %v441, 7
        %v443 = vsub.s32 4, %v442
        %v444 = vrot.slane %v282, %v443
        %v445 = vlaneseq
        %v446 = vshrl.u32 %v445, 7
        %v447 = vsub.s32 5, %v446
        %v448 = vrot.slane %v282, %v447
        %v449 = vlaneseq
        %v450 = vshrl.u32 %v449, 7
        %v451 = vsub.s32 6, %v450
        %v452 = vrot.slane %v282, %v451
        %v453 = vlaneseq
        %v454 = vshrl.u32 %v453, 7
        %v455 = vsub.s32 7, %v454
        %v456 = vrot.slane %v282, %v455
        %v457 = vlaneseq
        %v458 = vshrl.u32 %v457, 7
        %v459 = vsub.s32 0, %v458
        %v460 = vrot.slane %v284, %v459
        %v461 = vlaneseq
        %v462 = vshrl.u32 %v461, 7
        %v463 = vsub.s32 1, %v462
        %v464 = vrot.slane %v284, %v463
        %v465 = vlaneseq
        %v466 = vshrl.u32 %v465, 7
        %v467 = vsub.s32 2, %v466
        %v468 = vrot.slane %v284, %v467
        %v469 = vlaneseq
        %v470 = vshrl.u32 %v469, 7
        %v471 = vsub.s32 3, %v470
        %v472 = vrot.slane %v284, %v471
        %v473 = vlaneseq
        %v474 = vshrl.u32 %v473, 7
        %v475 = vsub.s32 4, %v474
        %v476 = vrot.slane %v284, %v475
        %v477 = vlaneseq
        %v478 = vshrl.u32 %v477, 7
        %v479 = vsub.s32 5, %v478
        %v480 = vrot.slane %v284, %v479
        %v481 = vlaneseq
        %v482 = vshrl.u32 %v481, 7
        %v483 = vsub.s32 6, %v482
        %v484 = vrot.slane %v284, %v483
        %v485 = vlaneseq
        %v486 = vshrl.u32 %v485, 7
        %v487 = vsub.s32 7, %v486
        %v488 = vrot.slane %v284, %v487
        %v489 = vlaneseq
        %v490 = vshrl.u32 %v489, 7
        %v491 = vsub.s32 0, %v490
        %v492 = vrot.slane %v286, %v491
        %v493 = vlaneseq
        %v494 = vshrl.u32 %v493, 7
        %v495 = vsub.s32 1, %v494
        %v496 = vrot.slane %v286, %v495
        %v497 = vlaneseq
        %v498 = vshrl.u32 %v497, 7
        %v499 = vsub.s32 2, %v498
        %v500 = vrot.slane %v286, %v499
        %v501 = vlaneseq
        %v502 = vshrl.u32 %v501, 7
        %v503 = vsub.s32 3, %v502
        %v504 = vrot.slane %v286, %v503
        %v505 = vlaneseq
        %v506 = vshrl.u32 %v505, 7
        %v507 = vsub.s32 4, %v506
        %v508 = vrot.slane %v286, %v507
        %v509 = vlaneseq
        %v510 = vshrl.u32 %v509, 7
        %v511 = vsub.s32 5, %v510
        %v512 = vrot.slane %v286, %v511
        %v513 = vlaneseq
        %v514 = vshrl.u32 %v513, 7
        %v515 = vsub.s32 6, %v514
        %v516 = vrot.slane %v286, %v515
        %v517 = vlaneseq
        %v518 = vshrl.u32 %v517, 7
        %v519 = vsub.s32 7, %v518
        %v520 = vrot.slane %v286, %v519
        %v521 = vlaneseq
        %v522 = vshrl.u32 %v521, 7
        %v523 = vsub.s32 0, %v522
        %v524 = vrot.slane %v288, %v523
        %v525 = vlaneseq
        %v526 = vshrl.u32 %v525, 7
        %v527 = vsub.s32 1, %v526
        %v528 = vrot.slane %v288, %v527
        %v529 = vlaneseq
        %v530 = vshrl.u32 %v529, 7
        %v531 = vsub.s32 2, %v530
        %v532 = vrot.slane %v288, %v531
        %v533 = vlaneseq
        %v534 = vshrl.u32 %v533, 7
        %v535 = vsub.s32 3, %v534
        %v536 = vrot.slane %v288, %v535
        %v537 = vlaneseq
        %v538 = vshrl.u32 %v537, 7
        %v539 = vsub.s32 4, %v538
        %v540 = vrot.slane %v288, %v539
        %v541 = vlaneseq
        %v542 = vshrl.u32 %v541, 7
        %v543 = vsub.s32 5, %v542
        %v544 = vrot.slane %v288, %v543
        %v545 = vlaneseq
        %v546 = vshrl.u32 %v545, 7
        %v547 = vsub.s32 6, %v546
        %v548 = vrot.slane %v288, %v547
        %v549 = vlaneseq
        %v550 = vshrl.u32 %v549, 7
        %v551 = vsub.s32 7, %v550
        %v552 = vrot.slane %v288, %v551
        %v553 = vcombine.low %v300, %v304
        %v554 = vcombine.low %v308, %v312
        %v555 = vcombine.low %v316, %v320
        %v556 = vcombine.low %v324, %v328
        %v558 = vunpack.c.l.s4 1966171168
        %v559 = vunpack.c.0.s8 %v558
        %v560 = vlaneseq
        %v561 = vshrl.u32 %v560, 7
        %v562 = vsub.s32 %v559, %v561
        %v563 = vrot.slane %v553, %v562
        %v565 = vunpack.c.l.s4 1966171168
        %v566 = vunpack.c.0.s8 %v565
        %v567 = vlaneseq
        %v568 = vshrl.u32 %v567, 7
        %v569 = vsub.s32 %v566, %v568
        %v570 = vrot.slane %v554, %v569
        %v572 = vunpack.c.l.s4 1966171168
        %v573 = vunpack.c.0.s8 %v572
        %v574 = vlaneseq
        %v575 = vshrl.u32 %v574, 7
        %v576 = vsub.s32 %v573, %v575
        %v577 = vrot.slane %v555, %v576
        %v579 = vunpack.c.l.s4 1966171168
        %v580 = vunpack.c.0.s8 %v579
        %v581 = vlaneseq
        %v582 = vshrl.u32 %v581, 7
        %v583 = vsub.s32 %v580, %v582
        %v584 = vrot.slane %v556, %v583
        %v585 = vcombine.low %v563, %v570
        %v586 = vcombine.low %v577, %v584
        %v588 = vunpack.c.l.s4 1966171168
        %v589 = vunpack.c.0.s8 %v588
        %v590 = vlaneseq
        %v591 = vshrl.u32 %v590, 7
        %v592 = vsub.s32 %v589, %v591
        %v593 = vrot.slane %v585, %v592
        %v595 = vunpack.c.l.s4 1966171168
        %v596 = vunpack.c.0.s8 %v595
        %v597 = vlaneseq
        %v598 = vshrl.u32 %v597, 7
        %v599 = vsub.s32 %v596, %v598
        %v600 = vrot.slane %v586, %v599
        %v601 = vcombine.low %v593, %v600
        %v602 = vcombine.low %v332, %v336
        %v603 = vcombine.low %v340, %v344
        %v604 = vcombine.low %v348, %v352
        %v605 = vcombine.low %v356, %v360
        %v607 = vunpack.c.l.s4 1966171168
        %v608 = vunpack.c.0.s8 %v607
        %v609 = vlaneseq
        %v610 = vshrl.u32 %v609, 7
        %v611 = vsub.s32 %v608, %v610
        %v612 = vrot.slane %v602, %v611
        %v614 = vunpack.c.l.s4 1966171168
        %v615 = vunpack.c.0.s8 %v614
        %v616 = vlaneseq
        %v617 = vshrl.u32 %v616, 7
        %v618 = vsub.s32 %v615, %v617
        %v619 = vrot.slane %v603, %v618
        %v621 = vunpack.c.l.s4 1966171168
        %v622 = vunpack.c.0.s8 %v621
        %v623 = vlaneseq
        %v624 = vshrl.u32 %v623, 7
        %v625 = vsub.s32 %v622, %v624
        %v626 = vrot.slane %v604, %v625
        %v628 = vunpack.c.l.s4 1966171168
        %v629 = vunpack.c.0.s8 %v628
        %v630 = vlaneseq
        %v631 = vshrl.u32 %v630, 7
        %v632 = vsub.s32 %v629, %v631
        %v633 = vrot.slane %v605, %v632
        %v634 = vcombine.low %v612, %v619
        %v635 = vcombine.low %v626, %v633
        %v637 = vunpack.c.l.s4 1966171168
        %v638 = vunpack.c.0.s8 %v637
        %v639 = vlaneseq
        %v640 = vshrl.u32 %v639, 7
        %v641 = vsub.s32 %v638, %v640
        %v642 = vrot.slane %v634, %v641
        %v644 = vunpack.c.l.s4 1966171168
        %v645 = vunpack.c.0.s8 %v644
        %v646 = vlaneseq
        %v647 = vshrl.u32 %v646, 7
        %v648 = vsub.s32 %v645, %v647
        %v649 = vrot.slane %v635, %v648
        %v650 = vcombine.low %v642, %v649
        %v651 = vcombine.low %v364, %v368
        %v652 = vcombine.low %v372, %v376
        %v653 = vcombine.low %v380, %v384
        %v654 = vcombine.low %v388, %v392
        %v656 = vunpack.c.l.s4 1966171168
        %v657 = vunpack.c.0.s8 %v656
        %v658 = vlaneseq
        %v659 = vshrl.u32 %v658, 7
        %v660 = vsub.s32 %v657, %v659
        %v661 = vrot.slane %v651, %v660
        %v663 = vunpack.c.l.s4 1966171168
        %v664 = vunpack.c.0.s8 %v663
        %v665 = vlaneseq
        %v666 = vshrl.u32 %v665, 7
        %v667 = vsub.s32 %v664, %v666
        %v668 = vrot.slane %v652, %v667
        %v670 = vunpack.c.l.s4 1966171168
        %v671 = vunpack.c.0.s8 %v670
        %v672 = vlaneseq
        %v673 = vshrl.u32 %v672, 7
        %v674 = vsub.s32 %v671, %v673
        %v675 = vrot.slane %v653, %v674
        %v677 = vunpack.c.l.s4 1966171168
        %v678 = vunpack.c.0.s8 %v677
        %v679 = vlaneseq
        %v680 = vshrl.u32 %v679, 7
        %v681 = vsub.s32 %v678, %v680
        %v682 = vrot.slane %v654, %v681
        %v683 = vcombine.low %v661, %v668
        %v684 = vcombine.low %v675, %v682
        %v686 = vunpack.c.l.s4 1966171168
        %v687 = vunpack.c.0.s8 %v686
        %v688 = vlaneseq
        %v689 = vshrl.u32 %v688, 7
        %v690 = vsub.s32 %v687, %v689
        %v691 = vrot.slane %v683, %v690
        %v693 = vunpack.c.l.s4 1966171168
        %v694 = vunpack.c.0.s8 %v693
        %v695 = vlaneseq
        %v696 = vshrl.u32 %v695, 7
        %v697 = vsub.s32 %v694, %v696
        %v698 = vrot.slane %v684, %v697
        %v699 = vcombine.low %v691, %v698
        %v700 = vcombine.low %v396, %v400
        %v701 = vcombine.low %v404, %v408
        %v702 = vcombine.low %v412, %v416
        %v703 = vcombine.low %v420, %v424
        %v705 = vunpack.c.l.s4 1966171168
        %v706 = vunpack.c.0.s8 %v705
        %v707 = vlaneseq
        %v708 = vshrl.u32 %v707, 7
        %v709 = vsub.s32 %v706, %v708
        %v710 = vrot.slane %v700, %v709
        %v712 = vunpack.c.l.s4 1966171168
        %v713 = vunpack.c.0.s8 %v712
        %v714 = vlaneseq
        %v715 = vshrl.u32 %v714, 7
        %v716 = vsub.s32 %v713, %v715
        %v717 = vrot.slane %v701, %v716
        %v719 = vunpack.c.l.s4 1966171168
        %v720 = vunpack.c.0.s8 %v719
        %v721 = vlaneseq
        %v722 = vshrl.u32 %v721, 7
        %v723 = vsub.s32 %v720, %v722
        %v724 = vrot.slane %v702, %v723
        %v726 = vunpack.c.l.s4 1966171168
        %v727 = vunpack.c.0.s8 %v726
        %v728 = vlaneseq
        %v729 = vshrl.u32 %v728, 7
        %v730 = vsub.s32 %v727, %v729
        %v731 = vrot.slane %v703, %v730
        %v732 = vcombine.low %v710, %v717
        %v733 = vcombine.low %v724, %v731
        %v735 = vunpack.c.l.s4 1966171168
        %v736 = vunpack.c.0.s8 %v735
        %v737 = vlaneseq
        %v738 = vshrl.u32 %v737, 7
        %v739 = vsub.s32 %v736, %v738
        %v740 = vrot.slane %v732, %v739
        %v742 = vunpack.c.l.s4 1966171168
        %v743 = vunpack.c.0.s8 %v742
        %v744 = vlaneseq
        %v745 = vshrl.u32 %v744, 7
        %v746 = vsub.s32 %v743, %v745
        %v747 = vrot.slane %v733, %v746
        %v748 = vcombine.low %v740, %v747
        %v749 = vcombine.low %v428, %v432
        %v750 = vcombine.low %v436, %v440
        %v751 = vcombine.low %v444, %v448
        %v752 = vcombine.low %v452, %v456
        %v754 = vunpack.c.l.s4 1966171168
        %v755 = vunpack.c.0.s8 %v754
        %v756 = vlaneseq
        %v757 = vshrl.u32 %v756, 7
        %v758 = vsub.s32 %v755, %v757
        %v759 = vrot.slane %v749, %v758
        %v761 = vunpack.c.l.s4 1966171168
        %v762 = vunpack.c.0.s8 %v761
        %v763 = vlaneseq
        %v764 = vshrl.u32 %v763, 7
        %v765 = vsub.s32 %v762, %v764
        %v766 = vrot.slane %v750, %v765
        %v768 = vunpack.c.l.s4 1966171168
        %v769 = vunpack.c.0.s8 %v768
        %v770 = vlaneseq
        %v771 = vshrl.u32 %v770, 7
        %v772 = vsub.s32 %v769, %v771
        %v773 = vrot.slane %v751, %v772
        %v775 = vunpack.c.l.s4 1966171168
        %v776 = vunpack.c.0.s8 %v775
        %v777 = vlaneseq
        %v778 = vshrl.u32 %v777, 7
        %v779 = vsub.s32 %v776, %v778
        %v780 = vrot.slane %v752, %v779
        %v781 = vcombine.low %v759, %v766
        %v782 = vcombine.low %v773, %v780
        %v784 = vunpack.c.l.s4 1966171168
        %v785 = vunpack.c.0.s8 %v784
        %v786 = vlaneseq
        %v787 = vshrl.u32 %v786, 7
        %v788 = vsub.s32 %v785, %v787
        %v789 = vrot.slane %v781, %v788
        %v791 = vunpack.c.l.s4 1966171168
        %v792 = vunpack.c.0.s8 %v791
        %v793 = vlaneseq
        %v794 = vshrl.u32 %v793, 7
        %v795 = vsub.s32 %v792, %v794
        %v796 = vrot.slane %v782, %v795
        %v797 = vcombine.low %v789, %v796
        %v798 = vcombine.low %v460, %v464
        %v799 = vcombine.low %v468, %v472
        %v800 = vcombine.low %v476, %v480
        %v801 = vcombine.low %v484, %v488
        %v803 = vunpack.c.l.s4 1966171168
        %v804 = vunpack.c.0.s8 %v803
        %v805 = vlaneseq
        %v806 = vshrl.u32 %v805, 7
        %v807 = vsub.s32 %v804, %v806
        %v808 = vrot.slane %v798, %v807
        %v810 = vunpack.c.l.s4 1966171168
        %v811 = vunpack.c.0.s8 %v810
        %v812 = vlaneseq
        %v813 = vshrl.u32 %v812, 7
        %v814 = vsub.s32 %v811, %v813
        %v815 = vrot.slane %v799, %v814
        %v817 = vunpack.c.l.s4 1966171168
        %v818 = vunpack.c.0.s8 %v817
        %v819 = vlaneseq
        %v820 = vshrl.u32 %v819, 7
        %v821 = vsub.s32 %v818, %v820
        %v822 = vrot.slane %v800, %v821
        %v824 = vunpack.c.l.s4 1966171168
        %v825 = vunpack.c.0.s8 %v824
        %v826 = vlaneseq
        %v827 = vshrl.u32 %v826, 7
        %v828 = vsub.s32 %v825, %v827
        %v829 = vrot.slane %v801, %v828
        %v830 = vcombine.low %v808, %v815
        %v831 = vcombine.low %v822, %v829
        %v833 = vunpack.c.l.s4 1966171168
        %v834 = vunpack.c.0.s8 %v833
        %v835 = vlaneseq
        %v836 = vshrl.u32 %v835, 7
        %v837 = vsub.s32 %v834, %v836
        %v838 = vrot.slane %v830, %v837
        %v840 = vunpack.c.l.s4 1966171168
        %v841 = vunpack.c.0.s8 %v840
        %v842 = vlaneseq
        %v843 = vshrl.u32 %v842, 7
        %v844 = vsub.s32 %v841, %v843
        %v845 = vrot.slane %v831, %v844
        %v846 = vcombine.low %v838, %v845
        %v847 = vcombine.low %v492, %v496
        %v848 = vcombine.low %v500, %v504
        %v849 = vcombine.low %v508, %v512
        %v850 = vcombine.low %v516, %v520
        %v852 = vunpack.c.l.s4 1966171168
        %v853 = vunpack.c.0.s8 %v852
        %v854 = vlaneseq
        %v855 = vshrl.u32 %v854, 7
        %v856 = vsub.s32 %v853, %v855
        %v857 = vrot.slane %v847, %v856
        %v859 = vunpack.c.l.s4 1966171168
        %v860 = vunpack.c.0.s8 %v859
        %v861 = vlaneseq
        %v862 = vshrl.u32 %v861, 7
        %v863 = vsub.s32 %v860, %v862
        %v864 = vrot.slane %v848, %v863
        %v866 = vunpack.c.l.s4 1966171168
        %v867 = vunpack.c.0.s8 %v866
        %v868 = vlaneseq
        %v869 = vshrl.u32 %v868, 7
        %v870 = vsub.s32 %v867, %v869
        %v871 = vrot.slane %v849, %v870
        %v873 = vunpack.c.l.s4 1966171168
        %v874 = vunpack.c.0.s8 %v873
        %v875 = vlaneseq
        %v876 = vshrl.u32 %v875, 7
        %v877 = vsub.s32 %v874, %v876
        %v878 = vrot.slane %v850, %v877
        %v879 = vcombine.low %v857, %v864
        %v880 = vcombine.low %v871, %v878
        %v882 = vunpack.c.l.s4 1966171168
        %v883 = vunpack.c.0.s8 %v882
        %v884 = vlaneseq
        %v885 = vshrl.u32 %v884, 7
        %v886 = vsub.s32 %v883, %v885
        %v887 = vrot.slane %v879, %v886
        %v889 = vunpack.c.l.s4 1966171168
        %v890 = vunpack.c.0.s8 %v889
        %v891 = vlaneseq
        %v892 = vshrl.u32 %v891, 7
        %v893 = vsub.s32 %v890, %v892
        %v894 = vrot.slane %v880, %v893
        %v895 = vcombine.low %v887, %v894
        %v896 = vcombine.low %v524, %v528
        %v897 = vcombine.low %v532, %v536
        %v898 = vcombine.low %v540, %v544
        %v899 = vcombine.low %v548, %v552
        %v901 = vunpack.c.l.s4 1966171168
        %v902 = vunpack.c.0.s8 %v901
        %v903 = vlaneseq
        %v904 = vshrl.u32 %v903, 7
        %v905 = vsub.s32 %v902, %v904
        %v906 = vrot.slane %v896, %v905
        %v908 = vunpack.c.l.s4 1966171168
        %v909 = vunpack.c.0.s8 %v908
        %v910 = vlaneseq
        %v911 = vshrl.u32 %v910, 7
        %v912 = vsub.s32 %v909, %v911
        %v913 = vrot.slane %v897, %v912
        %v915 = vunpack.c.l.s4 1966171168
        %v916 = vunpack.c.0.s8 %v915
        %v917 = vlaneseq
        %v918 = vshrl.u32 %v917, 7
        %v919 = vsub.s32 %v916, %v918
        %v920 = vrot.slane %v898, %v919
        %v922 = vunpack.c.l.s4 1966171168
        %v923 = vunpack.c.0.s8 %v922
        %v924 = vlaneseq
        %v925 = vshrl.u32 %v924, 7
        %v926 = vsub.s32 %v923, %v925
        %v927 = vrot.slane %v899, %v926
        %v928 = vcombine.low %v906, %v913
        %v929 = vcombine.low %v920, %v927
        %v931 = vunpack.c.l.s4 1966171168
        %v932 = vunpack.c.0.s8 %v931
        %v933 = vlaneseq
        %v934 = vshrl.u32 %v933, 7
        %v935 = vsub.s32 %v932, %v934
        %v936 = vrot.slane %v928, %v935
        %v938 = vunpack.c.l.s4 1966171168
        %v939 = vunpack.c.0.s8 %v938
        %v940 = vlaneseq
        %v941 = vshrl.u32 %v940, 7
        %v942 = vsub.s32 %v939, %v941
        %v943 = vrot.slane %v929, %v942
        %v944 = vcombine.low %v936, %v943
        %945 = vset.pattern.permute.xlu0 0
        %946 = vperm.xlu0 %945, %v601
        %v947 = vpop.permute.xlu0 %946
        %948 = vset.pattern.permute.xlu0 0
        %949 = vperm.xlu0 %948, %v650
        %v950 = vpop.permute.xlu0 %949
        %951 = vset.pattern.permute.xlu0 0
        %952 = vperm.xlu0 %951, %v699
        %v953 = vpop.permute.xlu0 %952
        %954 = vset.pattern.permute.xlu0 0
        %955 = vperm.xlu0 %954, %v748
        %v956 = vpop.permute.xlu0 %955
        %957 = vset.pattern.permute.xlu0 0
        %958 = vperm.xlu0 %957, %v797
        %v959 = vpop.permute.xlu0 %958
        %960 = vset.pattern.permute.xlu0 0
        %961 = vperm.xlu0 %960, %v846
        %v962 = vpop.permute.xlu0 %961
        %963 = vset.pattern.permute.xlu0 0
        %964 = vperm.xlu0 %963, %v895
        %v965 = vpop.permute.xlu0 %964
        %966 = vset.pattern.permute.xlu0 0
        %967 = vperm.xlu0 %966, %v944
        %v968 = vpop.permute.xlu0 %967
        %v969 = vlaneseq
        %v970 = vand.u32 %v969, 127
        %v971 = vlaneseq
        %v972 = vshrl.u32 %v971, 7
        %v973 = vsub.s32 %v970, %v972
        %v974 = vrot.slane %v947, %v973
        %v975 = vadd.s32 %v970, 4294967288
        %v976 = vlaneseq
        %v977 = vshrl.u32 %v976, 7
        %v978 = vsub.s32 %v975, %v977
        %v979 = vrot.slane %v950, %v978
        %vm980 = vcmask 130112
        %v981 = vsel %vm980, %v979, %v974
        %v982 = vadd.s32 %v970, 4294967280
        %v983 = vlaneseq
        %v984 = vshrl.u32 %v983, 7
        %v985 = vsub.s32 %v982, %v984
        %v986 = vrot.slane %v953, %v985
        %vm987 = vcmask 195712
        %v988 = vsel %vm987, %v986, %v981
        %v989 = vadd.s32 %v970, 4294967272
        %v990 = vlaneseq
        %v991 = vshrl.u32 %v990, 7
        %v992 = vsub.s32 %v989, %v991
        %v993 = vrot.slane %v956, %v992
        %vm994 = vcmask 261312
        %v995 = vsel %vm994, %v993, %v988
        %v996 = vadd.s32 %v970, 4294967264
        %v997 = vlaneseq
        %v998 = vshrl.u32 %v997, 7
        %v999 = vsub.s32 %v996, %v998
        %v1000 = vrot.slane %v959, %v999
        %vm1001 = vcmask 326912
        %v1002 = vsel %vm1001, %v1000, %v995
        %v1003 = vadd.s32 %v970, 4294967256
        %v1004 = vlaneseq
        %v1005 = vshrl.u32 %v1004, 7
        %v1006 = vsub.s32 %v1003, %v1005
        %v1007 = vrot.slane %v962, %v1006
        %vm1008 = vcmask 392512
        %v1009 = vsel %vm1008, %v1007, %v1002
        %v1010 = vadd.s32 %v970, 4294967248
        %v1011 = vlaneseq
        %v1012 = vshrl.u32 %v1011, 7
        %v1013 = vsub.s32 %v1010, %v1012
        %v1014 = vrot.slane %v965, %v1013
        %vm1015 = vcmask 458112
        %v1016 = vsel %vm1015, %v1014, %v1009
        %v1017 = vadd.s32 %v970, 4294967240
        %v1018 = vlaneseq
        %v1019 = vshrl.u32 %v1018, 7
        %v1020 = vsub.s32 %v1017, %v1019
        %v1021 = vrot.slane %v968, %v1020
        %vm1022 = vcmask 523712
        %v1023 = vsel %vm1022, %v1021, %v1016
        %v1025 = vunpack.c.l.s4 1966171168
        %v1026 = vunpack.c.0.s8 %v1025
        %v1027 = vlaneseq
        %v1028 = vshrl.u32 %v1027, 7
        %v1029 = vsub.s32 %v1026, %v1028
        %v1030 = vrot.slane %v1023, %v1029
        %v1032 = vunpack.c.l.s4 1966171168
        %v1033 = vunpack.c.0.s8 %v1032
        %v1034 = vlaneseq
        %v1035 = vshrl.u32 %v1034, 7
        %v1036 = vsub.s32 %v1033, %v1035
        %v1037 = vrot.slane %v1030, %v1036
        %v1039 = vadd.f32 %v272, %v1037
        %vm1040 = vcmask 516096
        %1041 = vst.msk [vmem:[#allocation2] sm:$0x1] %vm1040, %v1039
        %v1042 = vld [vmem:[#allocation3] sm:$0x1]
        %1043 = vmax.xlane.f32.xlu0 %v264
        %v1044 = vpop.xlane.xlu0 %1043
        %1045 = vmax.xlane.f32.xlu0 %v265
        %v1046 = vpop.xlane.xlu0 %1045
        %1047 = vmax.xlane.f32.xlu0 %v266
        %v1048 = vpop.xlane.xlu0 %1047
        %1049 = vmax.xlane.f32.xlu0 %v267
        %v1050 = vpop.xlane.xlu0 %1049
        %1051 = vmax.xlane.f32.xlu0 %v268
        %v1052 = vpop.xlane.xlu0 %1051
        %1053 = vmax.xlane.f32.xlu0 %v269
        %v1054 = vpop.xlane.xlu0 %1053
        %1055 = vmax.xlane.f32.xlu0 %v270
        %v1056 = vpop.xlane.xlu0 %1055
        %1057 = vmax.xlane.f32.xlu0 %v271
        %v1058 = vpop.xlane.xlu0 %1057
        %v1067 = vlaneseq
        %v1068 = vshrl.u32 %v1067, 7
        %v1069 = vsub.s32 0, %v1068
        %v1070 = vrot.slane %v1044, %v1069
        %v1071 = vlaneseq
        %v1072 = vshrl.u32 %v1071, 7
        %v1073 = vsub.s32 1, %v1072
        %v1074 = vrot.slane %v1044, %v1073
        %v1075 = vlaneseq
        %v1076 = vshrl.u32 %v1075, 7
        %v1077 = vsub.s32 2, %v1076
        %v1078 = vrot.slane %v1044, %v1077
        %v1079 = vlaneseq
        %v1080 = vshrl.u32 %v1079, 7
        %v1081 = vsub.s32 3, %v1080
        %v1082 = vrot.slane %v1044, %v1081
        %v1083 = vlaneseq
        %v1084 = vshrl.u32 %v1083, 7
        %v1085 = vsub.s32 4, %v1084
        %v1086 = vrot.slane %v1044, %v1085
        %v1087 = vlaneseq
        %v1088 = vshrl.u32 %v1087, 7
        %v1089 = vsub.s32 5, %v1088
        %v1090 = vrot.slane %v1044, %v1089
        %v1091 = vlaneseq
        %v1092 = vshrl.u32 %v1091, 7
        %v1093 = vsub.s32 6, %v1092
        %v1094 = vrot.slane %v1044, %v1093
        %v1095 = vlaneseq
        %v1096 = vshrl.u32 %v1095, 7
        %v1097 = vsub.s32 7, %v1096
        %v1098 = vrot.slane %v1044, %v1097
        %v1099 = vlaneseq
        %v1100 = vshrl.u32 %v1099, 7
        %v1101 = vsub.s32 0, %v1100
        %v1102 = vrot.slane %v1046, %v1101
        %v1103 = vlaneseq
        %v1104 = vshrl.u32 %v1103, 7
        %v1105 = vsub.s32 1, %v1104
        %v1106 = vrot.slane %v1046, %v1105
        %v1107 = vlaneseq
        %v1108 = vshrl.u32 %v1107, 7
        %v1109 = vsub.s32 2, %v1108
        %v1110 = vrot.slane %v1046, %v1109
        %v1111 = vlaneseq
        %v1112 = vshrl.u32 %v1111, 7
        %v1113 = vsub.s32 3, %v1112
        %v1114 = vrot.slane %v1046, %v1113
        %v1115 = vlaneseq
        %v1116 = vshrl.u32 %v1115, 7
        %v1117 = vsub.s32 4, %v1116
        %v1118 = vrot.slane %v1046, %v1117
        %v1119 = vlaneseq
        %v1120 = vshrl.u32 %v1119, 7
        %v1121 = vsub.s32 5, %v1120
        %v1122 = vrot.slane %v1046, %v1121
        %v1123 = vlaneseq
        %v1124 = vshrl.u32 %v1123, 7
        %v1125 = vsub.s32 6, %v1124
        %v1126 = vrot.slane %v1046, %v1125
        %v1127 = vlaneseq
        %v1128 = vshrl.u32 %v1127, 7
        %v1129 = vsub.s32 7, %v1128
        %v1130 = vrot.slane %v1046, %v1129
        %v1131 = vlaneseq
        %v1132 = vshrl.u32 %v1131, 7
        %v1133 = vsub.s32 0, %v1132
        %v1134 = vrot.slane %v1048, %v1133
        %v1135 = vlaneseq
        %v1136 = vshrl.u32 %v1135, 7
        %v1137 = vsub.s32 1, %v1136
        %v1138 = vrot.slane %v1048, %v1137
        %v1139 = vlaneseq
        %v1140 = vshrl.u32 %v1139, 7
        %v1141 = vsub.s32 2, %v1140
        %v1142 = vrot.slane %v1048, %v1141
        %v1143 = vlaneseq
        %v1144 = vshrl.u32 %v1143, 7
        %v1145 = vsub.s32 3, %v1144
        %v1146 = vrot.slane %v1048, %v1145
        %v1147 = vlaneseq
        %v1148 = vshrl.u32 %v1147, 7
        %v1149 = vsub.s32 4, %v1148
        %v1150 = vrot.slane %v1048, %v1149
        %v1151 = vlaneseq
        %v1152 = vshrl.u32 %v1151, 7
        %v1153 = vsub.s32 5, %v1152
        %v1154 = vrot.slane %v1048, %v1153
        %v1155 = vlaneseq
        %v1156 = vshrl.u32 %v1155, 7
        %v1157 = vsub.s32 6, %v1156
        %v1158 = vrot.slane %v1048, %v1157
        %v1159 = vlaneseq
        %v1160 = vshrl.u32 %v1159, 7
        %v1161 = vsub.s32 7, %v1160
        %v1162 = vrot.slane %v1048, %v1161
        %v1163 = vlaneseq
        %v1164 = vshrl.u32 %v1163, 7
        %v1165 = vsub.s32 0, %v1164
        %v1166 = vrot.slane %v1050, %v1165
        %v1167 = vlaneseq
        %v1168 = vshrl.u32 %v1167, 7
        %v1169 = vsub.s32 1, %v1168
        %v1170 = vrot.slane %v1050, %v1169
        %v1171 = vlaneseq
        %v1172 = vshrl.u32 %v1171, 7
        %v1173 = vsub.s32 2, %v1172
        %v1174 = vrot.slane %v1050, %v1173
        %v1175 = vlaneseq
        %v1176 = vshrl.u32 %v1175, 7
        %v1177 = vsub.s32 3, %v1176
        %v1178 = vrot.slane %v1050, %v1177
        %v1179 = vlaneseq
        %v1180 = vshrl.u32 %v1179, 7
        %v1181 = vsub.s32 4, %v1180
        %v1182 = vrot.slane %v1050, %v1181
        %v1183 = vlaneseq
        %v1184 = vshrl.u32 %v1183, 7
        %v1185 = vsub.s32 5, %v1184
        %v1186 = vrot.slane %v1050, %v1185
        %v1187 = vlaneseq
        %v1188 = vshrl.u32 %v1187, 7
        %v1189 = vsub.s32 6, %v1188
        %v1190 = vrot.slane %v1050, %v1189
        %v1191 = vlaneseq
        %v1192 = vshrl.u32 %v1191, 7
        %v1193 = vsub.s32 7, %v1192
        %v1194 = vrot.slane %v1050, %v1193
        %v1195 = vlaneseq
        %v1196 = vshrl.u32 %v1195, 7
        %v1197 = vsub.s32 0, %v1196
        %v1198 = vrot.slane %v1052, %v1197
        %v1199 = vlaneseq
        %v1200 = vshrl.u32 %v1199, 7
        %v1201 = vsub.s32 1, %v1200
        %v1202 = vrot.slane %v1052, %v1201
        %v1203 = vlaneseq
        %v1204 = vshrl.u32 %v1203, 7
        %v1205 = vsub.s32 2, %v1204
        %v1206 = vrot.slane %v1052, %v1205
        %v1207 = vlaneseq
        %v1208 = vshrl.u32 %v1207, 7
        %v1209 = vsub.s32 3, %v1208
        %v1210 = vrot.slane %v1052, %v1209
        %v1211 = vlaneseq
        %v1212 = vshrl.u32 %v1211, 7
        %v1213 = vsub.s32 4, %v1212
        %v1214 = vrot.slane %v1052, %v1213
        %v1215 = vlaneseq
        %v1216 = vshrl.u32 %v1215, 7
        %v1217 = vsub.s32 5, %v1216
        %v1218 = vrot.slane %v1052, %v1217
        %v1219 = vlaneseq
        %v1220 = vshrl.u32 %v1219, 7
        %v1221 = vsub.s32 6, %v1220
        %v1222 = vrot.slane %v1052, %v1221
        %v1223 = vlaneseq
        %v1224 = vshrl.u32 %v1223, 7
        %v1225 = vsub.s32 7, %v1224
        %v1226 = vrot.slane %v1052, %v1225
        %v1227 = vlaneseq
        %v1228 = vshrl.u32 %v1227, 7
        %v1229 = vsub.s32 0, %v1228
        %v1230 = vrot.slane %v1054, %v1229
        %v1231 = vlaneseq
        %v1232 = vshrl.u32 %v1231, 7
        %v1233 = vsub.s32 1, %v1232
        %v1234 = vrot.slane %v1054, %v1233
        %v1235 = vlaneseq
        %v1236 = vshrl.u32 %v1235, 7
        %v1237 = vsub.s32 2, %v1236
        %v1238 = vrot.slane %v1054, %v1237
        %v1239 = vlaneseq
        %v1240 = vshrl.u32 %v1239, 7
        %v1241 = vsub.s32 3, %v1240
        %v1242 = vrot.slane %v1054, %v1241
        %v1243 = vlaneseq
        %v1244 = vshrl.u32 %v1243, 7
        %v1245 = vsub.s32 4, %v1244
        %v1246 = vrot.slane %v1054, %v1245
        %v1247 = vlaneseq
        %v1248 = vshrl.u32 %v1247, 7
        %v1249 = vsub.s32 5, %v1248
        %v1250 = vrot.slane %v1054, %v1249
        %v1251 = vlaneseq
        %v1252 = vshrl.u32 %v1251, 7
        %v1253 = vsub.s32 6, %v1252
        %v1254 = vrot.slane %v1054, %v1253
        %v1255 = vlaneseq
        %v1256 = vshrl.u32 %v1255, 7
        %v1257 = vsub.s32 7, %v1256
        %v1258 = vrot.slane %v1054, %v1257
        %v1259 = vlaneseq
        %v1260 = vshrl.u32 %v1259, 7
        %v1261 = vsub.s32 0, %v1260
        %v1262 = vrot.slane %v1056, %v1261
        %v1263 = vlaneseq
        %v1264 = vshrl.u32 %v1263, 7
        %v1265 = vsub.s32 1, %v1264
        %v1266 = vrot.slane %v1056, %v1265
        %v1267 = vlaneseq
        %v1268 = vshrl.u32 %v1267, 7
        %v1269 = vsub.s32 2, %v1268
        %v1270 = vrot.slane %v1056, %v1269
        %v1271 = vlaneseq
        %v1272 = vshrl.u32 %v1271, 7
        %v1273 = vsub.s32 3, %v1272
        %v1274 = vrot.slane %v1056, %v1273
        %v1275 = vlaneseq
        %v1276 = vshrl.u32 %v1275, 7
        %v1277 = vsub.s32 4, %v1276
        %v1278 = vrot.slane %v1056, %v1277
        %v1279 = vlaneseq
        %v1280 = vshrl.u32 %v1279, 7
        %v1281 = vsub.s32 5, %v1280
        %v1282 = vrot.slane %v1056, %v1281
        %v1283 = vlaneseq
        %v1284 = vshrl.u32 %v1283, 7
        %v1285 = vsub.s32 6, %v1284
        %v1286 = vrot.slane %v1056, %v1285
        %v1287 = vlaneseq
        %v1288 = vshrl.u32 %v1287, 7
        %v1289 = vsub.s32 7, %v1288
        %v1290 = vrot.slane %v1056, %v1289
        %v1291 = vlaneseq
        %v1292 = vshrl.u32 %v1291, 7
        %v1293 = vsub.s32 0, %v1292
        %v1294 = vrot.slane %v1058, %v1293
        %v1295 = vlaneseq
        %v1296 = vshrl.u32 %v1295, 7
        %v1297 = vsub.s32 1, %v1296
        %v1298 = vrot.slane %v1058, %v1297
        %v1299 = vlaneseq
        %v1300 = vshrl.u32 %v1299, 7
        %v1301 = vsub.s32 2, %v1300
        %v1302 = vrot.slane %v1058, %v1301
        %v1303 = vlaneseq
        %v1304 = vshrl.u32 %v1303, 7
        %v1305 = vsub.s32 3, %v1304
        %v1306 = vrot.slane %v1058, %v1305
        %v1307 = vlaneseq
        %v1308 = vshrl.u32 %v1307, 7
        %v1309 = vsub.s32 4, %v1308
        %v1310 = vrot.slane %v1058, %v1309
        %v1311 = vlaneseq
        %v1312 = vshrl.u32 %v1311, 7
        %v1313 = vsub.s32 5, %v1312
        %v1314 = vrot.slane %v1058, %v1313
        %v1315 = vlaneseq
        %v1316 = vshrl.u32 %v1315, 7
        %v1317 = vsub.s32 6, %v1316
        %v1318 = vrot.slane %v1058, %v1317
        %v1319 = vlaneseq
        %v1320 = vshrl.u32 %v1319, 7
        %v1321 = vsub.s32 7, %v1320
        %v1322 = vrot.slane %v1058, %v1321
        %v1323 = vcombine.low %v1070, %v1074
        %v1324 = vcombine.low %v1078, %v1082
        %v1325 = vcombine.low %v1086, %v1090
        %v1326 = vcombine.low %v1094, %v1098
        %v1328 = vunpack.c.l.s4 1966171168
        %v1329 = vunpack.c.0.s8 %v1328
        %v1330 = vlaneseq
        %v1331 = vshrl.u32 %v1330, 7
        %v1332 = vsub.s32 %v1329, %v1331
        %v1333 = vrot.slane %v1323, %v1332
        %v1335 = vunpack.c.l.s4 1966171168
        %v1336 = vunpack.c.0.s8 %v1335
        %v1337 = vlaneseq
        %v1338 = vshrl.u32 %v1337, 7
        %v1339 = vsub.s32 %v1336, %v1338
        %v1340 = vrot.slane %v1324, %v1339
        %v1342 = vunpack.c.l.s4 1966171168
        %v1343 = vunpack.c.0.s8 %v1342
        %v1344 = vlaneseq
        %v1345 = vshrl.u32 %v1344, 7
        %v1346 = vsub.s32 %v1343, %v1345
        %v1347 = vrot.slane %v1325, %v1346
        %v1349 = vunpack.c.l.s4 1966171168
        %v1350 = vunpack.c.0.s8 %v1349
        %v1351 = vlaneseq
        %v1352 = vshrl.u32 %v1351, 7
        %v1353 = vsub.s32 %v1350, %v1352
        %v1354 = vrot.slane %v1326, %v1353
        %v1355 = vcombine.low %v1333, %v1340
        %v1356 = vcombine.low %v1347, %v1354
        %v1358 = vunpack.c.l.s4 1966171168
        %v1359 = vunpack.c.0.s8 %v1358
        %v1360 = vlaneseq
        %v1361 = vshrl.u32 %v1360, 7
        %v1362 = vsub.s32 %v1359, %v1361
        %v1363 = vrot.slane %v1355, %v1362
        %v1365 = vunpack.c.l.s4 1966171168
        %v1366 = vunpack.c.0.s8 %v1365
        %v1367 = vlaneseq
        %v1368 = vshrl.u32 %v1367, 7
        %v1369 = vsub.s32 %v1366, %v1368
        %v1370 = vrot.slane %v1356, %v1369
        %v1371 = vcombine.low %v1363, %v1370
        %v1372 = vcombine.low %v1102, %v1106
        %v1373 = vcombine.low %v1110, %v1114
        %v1374 = vcombine.low %v1118, %v1122
        %v1375 = vcombine.low %v1126, %v1130
        %v1377 = vunpack.c.l.s4 1966171168
        %v1378 = vunpack.c.0.s8 %v1377
        %v1379 = vlaneseq
        %v1380 = vshrl.u32 %v1379, 7
        %v1381 = vsub.s32 %v1378, %v1380
        %v1382 = vrot.slane %v1372, %v1381
        %v1384 = vunpack.c.l.s4 1966171168
        %v1385 = vunpack.c.0.s8 %v1384
        %v1386 = vlaneseq
        %v1387 = vshrl.u32 %v1386, 7
        %v1388 = vsub.s32 %v1385, %v1387
        %v1389 = vrot.slane %v1373, %v1388
        %v1391 = vunpack.c.l.s4 1966171168
        %v1392 = vunpack.c.0.s8 %v1391
        %v1393 = vlaneseq
        %v1394 = vshrl.u32 %v1393, 7
        %v1395 = vsub.s32 %v1392, %v1394
        %v1396 = vrot.slane %v1374, %v1395
        %v1398 = vunpack.c.l.s4 1966171168
        %v1399 = vunpack.c.0.s8 %v1398
        %v1400 = vlaneseq
        %v1401 = vshrl.u32 %v1400, 7
        %v1402 = vsub.s32 %v1399, %v1401
        %v1403 = vrot.slane %v1375, %v1402
        %v1404 = vcombine.low %v1382, %v1389
        %v1405 = vcombine.low %v1396, %v1403
        %v1407 = vunpack.c.l.s4 1966171168
        %v1408 = vunpack.c.0.s8 %v1407
        %v1409 = vlaneseq
        %v1410 = vshrl.u32 %v1409, 7
        %v1411 = vsub.s32 %v1408, %v1410
        %v1412 = vrot.slane %v1404, %v1411
        %v1414 = vunpack.c.l.s4 1966171168
        %v1415 = vunpack.c.0.s8 %v1414
        %v1416 = vlaneseq
        %v1417 = vshrl.u32 %v1416, 7
        %v1418 = vsub.s32 %v1415, %v1417
        %v1419 = vrot.slane %v1405, %v1418
        %v1420 = vcombine.low %v1412, %v1419
        %v1421 = vcombine.low %v1134, %v1138
        %v1422 = vcombine.low %v1142, %v1146
        %v1423 = vcombine.low %v1150, %v1154
        %v1424 = vcombine.low %v1158, %v1162
        %v1426 = vunpack.c.l.s4 1966171168
        %v1427 = vunpack.c.0.s8 %v1426
        %v1428 = vlaneseq
        %v1429 = vshrl.u32 %v1428, 7
        %v1430 = vsub.s32 %v1427, %v1429
        %v1431 = vrot.slane %v1421, %v1430
        %v1433 = vunpack.c.l.s4 1966171168
        %v1434 = vunpack.c.0.s8 %v1433
        %v1435 = vlaneseq
        %v1436 = vshrl.u32 %v1435, 7
        %v1437 = vsub.s32 %v1434, %v1436
        %v1438 = vrot.slane %v1422, %v1437
        %v1440 = vunpack.c.l.s4 1966171168
        %v1441 = vunpack.c.0.s8 %v1440
        %v1442 = vlaneseq
        %v1443 = vshrl.u32 %v1442, 7
        %v1444 = vsub.s32 %v1441, %v1443
        %v1445 = vrot.slane %v1423, %v1444
        %v1447 = vunpack.c.l.s4 1966171168
        %v1448 = vunpack.c.0.s8 %v1447
        %v1449 = vlaneseq
        %v1450 = vshrl.u32 %v1449, 7
        %v1451 = vsub.s32 %v1448, %v1450
        %v1452 = vrot.slane %v1424, %v1451
        %v1453 = vcombine.low %v1431, %v1438
        %v1454 = vcombine.low %v1445, %v1452
        %v1456 = vunpack.c.l.s4 1966171168
        %v1457 = vunpack.c.0.s8 %v1456
        %v1458 = vlaneseq
        %v1459 = vshrl.u32 %v1458, 7
        %v1460 = vsub.s32 %v1457, %v1459
        %v1461 = vrot.slane %v1453, %v1460
        %v1463 = vunpack.c.l.s4 1966171168
        %v1464 = vunpack.c.0.s8 %v1463
        %v1465 = vlaneseq
        %v1466 = vshrl.u32 %v1465, 7
        %v1467 = vsub.s32 %v1464, %v1466
        %v1468 = vrot.slane %v1454, %v1467
        %v1469 = vcombine.low %v1461, %v1468
        %v1470 = vcombine.low %v1166, %v1170
        %v1471 = vcombine.low %v1174, %v1178
        %v1472 = vcombine.low %v1182, %v1186
        %v1473 = vcombine.low %v1190, %v1194
        %v1475 = vunpack.c.l.s4 1966171168
        %v1476 = vunpack.c.0.s8 %v1475
        %v1477 = vlaneseq
        %v1478 = vshrl.u32 %v1477, 7
        %v1479 = vsub.s32 %v1476, %v1478
        %v1480 = vrot.slane %v1470, %v1479
        %v1482 = vunpack.c.l.s4 1966171168
        %v1483 = vunpack.c.0.s8 %v1482
        %v1484 = vlaneseq
        %v1485 = vshrl.u32 %v1484, 7
        %v1486 = vsub.s32 %v1483, %v1485
        %v1487 = vrot.slane %v1471, %v1486
        %v1489 = vunpack.c.l.s4 1966171168
        %v1490 = vunpack.c.0.s8 %v1489
        %v1491 = vlaneseq
        %v1492 = vshrl.u32 %v1491, 7
        %v1493 = vsub.s32 %v1490, %v1492
        %v1494 = vrot.slane %v1472, %v1493
        %v1496 = vunpack.c.l.s4 1966171168
        %v1497 = vunpack.c.0.s8 %v1496
        %v1498 = vlaneseq
        %v1499 = vshrl.u32 %v1498, 7
        %v1500 = vsub.s32 %v1497, %v1499
        %v1501 = vrot.slane %v1473, %v1500
        %v1502 = vcombine.low %v1480, %v1487
        %v1503 = vcombine.low %v1494, %v1501
        %v1505 = vunpack.c.l.s4 1966171168
        %v1506 = vunpack.c.0.s8 %v1505
        %v1507 = vlaneseq
        %v1508 = vshrl.u32 %v1507, 7
        %v1509 = vsub.s32 %v1506, %v1508
        %v1510 = vrot.slane %v1502, %v1509
        %v1512 = vunpack.c.l.s4 1966171168
        %v1513 = vunpack.c.0.s8 %v1512
        %v1514 = vlaneseq
        %v1515 = vshrl.u32 %v1514, 7
        %v1516 = vsub.s32 %v1513, %v1515
        %v1517 = vrot.slane %v1503, %v1516
        %v1518 = vcombine.low %v1510, %v1517
        %v1519 = vcombine.low %v1198, %v1202
        %v1520 = vcombine.low %v1206, %v1210
        %v1521 = vcombine.low %v1214, %v1218
        %v1522 = vcombine.low %v1222, %v1226
        %v1524 = vunpack.c.l.s4 1966171168
        %v1525 = vunpack.c.0.s8 %v1524
        %v1526 = vlaneseq
        %v1527 = vshrl.u32 %v1526, 7
        %v1528 = vsub.s32 %v1525, %v1527
        %v1529 = vrot.slane %v1519, %v1528
        %v1531 = vunpack.c.l.s4 1966171168
        %v1532 = vunpack.c.0.s8 %v1531
        %v1533 = vlaneseq
        %v1534 = vshrl.u32 %v1533, 7
        %v1535 = vsub.s32 %v1532, %v1534
        %v1536 = vrot.slane %v1520, %v1535
        %v1538 = vunpack.c.l.s4 1966171168
        %v1539 = vunpack.c.0.s8 %v1538
        %v1540 = vlaneseq
        %v1541 = vshrl.u32 %v1540, 7
        %v1542 = vsub.s32 %v1539, %v1541
        %v1543 = vrot.slane %v1521, %v1542
        %v1545 = vunpack.c.l.s4 1966171168
        %v1546 = vunpack.c.0.s8 %v1545
        %v1547 = vlaneseq
        %v1548 = vshrl.u32 %v1547, 7
        %v1549 = vsub.s32 %v1546, %v1548
        %v1550 = vrot.slane %v1522, %v1549
        %v1551 = vcombine.low %v1529, %v1536
        %v1552 = vcombine.low %v1543, %v1550
        %v1554 = vunpack.c.l.s4 1966171168
        %v1555 = vunpack.c.0.s8 %v1554
        %v1556 = vlaneseq
        %v1557 = vshrl.u32 %v1556, 7
        %v1558 = vsub.s32 %v1555, %v1557
        %v1559 = vrot.slane %v1551, %v1558
        %v1561 = vunpack.c.l.s4 1966171168
        %v1562 = vunpack.c.0.s8 %v1561
        %v1563 = vlaneseq
        %v1564 = vshrl.u32 %v1563, 7
        %v1565 = vsub.s32 %v1562, %v1564
        %v1566 = vrot.slane %v1552, %v1565
        %v1567 = vcombine.low %v1559, %v1566
        %v1568 = vcombine.low %v1230, %v1234
        %v1569 = vcombine.low %v1238, %v1242
        %v1570 = vcombine.low %v1246, %v1250
        %v1571 = vcombine.low %v1254, %v1258
        %v1573 = vunpack.c.l.s4 1966171168
        %v1574 = vunpack.c.0.s8 %v1573
        %v1575 = vlaneseq
        %v1576 = vshrl.u32 %v1575, 7
        %v1577 = vsub.s32 %v1574, %v1576
        %v1578 = vrot.slane %v1568, %v1577
        %v1580 = vunpack.c.l.s4 1966171168
        %v1581 = vunpack.c.0.s8 %v1580
        %v1582 = vlaneseq
        %v1583 = vshrl.u32 %v1582, 7
        %v1584 = vsub.s32 %v1581, %v1583
        %v1585 = vrot.slane %v1569, %v1584
        %v1587 = vunpack.c.l.s4 1966171168
        %v1588 = vunpack.c.0.s8 %v1587
        %v1589 = vlaneseq
        %v1590 = vshrl.u32 %v1589, 7
        %v1591 = vsub.s32 %v1588, %v1590
        %v1592 = vrot.slane %v1570, %v1591
        %v1594 = vunpack.c.l.s4 1966171168
        %v1595 = vunpack.c.0.s8 %v1594
        %v1596 = vlaneseq
        %v1597 = vshrl.u32 %v1596, 7
        %v1598 = vsub.s32 %v1595, %v1597
        %v1599 = vrot.slane %v1571, %v1598
        %v1600 = vcombine.low %v1578, %v1585
        %v1601 = vcombine.low %v1592, %v1599
        %v1603 = vunpack.c.l.s4 1966171168
        %v1604 = vunpack.c.0.s8 %v1603
        %v1605 = vlaneseq
        %v1606 = vshrl.u32 %v1605, 7
        %v1607 = vsub.s32 %v1604, %v1606
        %v1608 = vrot.slane %v1600, %v1607
        %v1610 = vunpack.c.l.s4 1966171168
        %v1611 = vunpack.c.0.s8 %v1610
        %v1612 = vlaneseq
        %v1613 = vshrl.u32 %v1612, 7
        %v1614 = vsub.s32 %v1611, %v1613
        %v1615 = vrot.slane %v1601, %v1614
        %v1616 = vcombine.low %v1608, %v1615
        %v1617 = vcombine.low %v1262, %v1266
        %v1618 = vcombine.low %v1270, %v1274
        %v1619 = vcombine.low %v1278, %v1282
        %v1620 = vcombine.low %v1286, %v1290
        %v1622 = vunpack.c.l.s4 1966171168
        %v1623 = vunpack.c.0.s8 %v1622
        %v1624 = vlaneseq
        %v1625 = vshrl.u32 %v1624, 7
        %v1626 = vsub.s32 %v1623, %v1625
        %v1627 = vrot.slane %v1617, %v1626
        %v1629 = vunpack.c.l.s4 1966171168
        %v1630 = vunpack.c.0.s8 %v1629
        %v1631 = vlaneseq
        %v1632 = vshrl.u32 %v1631, 7
        %v1633 = vsub.s32 %v1630, %v1632
        %v1634 = vrot.slane %v1618, %v1633
        %v1636 = vunpack.c.l.s4 1966171168
        %v1637 = vunpack.c.0.s8 %v1636
        %v1638 = vlaneseq
        %v1639 = vshrl.u32 %v1638, 7
        %v1640 = vsub.s32 %v1637, %v1639
        %v1641 = vrot.slane %v1619, %v1640
        %v1643 = vunpack.c.l.s4 1966171168
        %v1644 = vunpack.c.0.s8 %v1643
        %v1645 = vlaneseq
        %v1646 = vshrl.u32 %v1645, 7
        %v1647 = vsub.s32 %v1644, %v1646
        %v1648 = vrot.slane %v1620, %v1647
        %v1649 = vcombine.low %v1627, %v1634
        %v1650 = vcombine.low %v1641, %v1648
        %v1652 = vunpack.c.l.s4 1966171168
        %v1653 = vunpack.c.0.s8 %v1652
        %v1654 = vlaneseq
        %v1655 = vshrl.u32 %v1654, 7
        %v1656 = vsub.s32 %v1653, %v1655
        %v1657 = vrot.slane %v1649, %v1656
        %v1659 = vunpack.c.l.s4 1966171168
        %v1660 = vunpack.c.0.s8 %v1659
        %v1661 = vlaneseq
        %v1662 = vshrl.u32 %v1661, 7
        %v1663 = vsub.s32 %v1660, %v1662
        %v1664 = vrot.slane %v1650, %v1663
        %v1665 = vcombine.low %v1657, %v1664
        %v1666 = vcombine.low %v1294, %v1298
        %v1667 = vcombine.low %v1302, %v1306
        %v1668 = vcombine.low %v1310, %v1314
        %v1669 = vcombine.low %v1318, %v1322
        %v1671 = vunpack.c.l.s4 1966171168
        %v1672 = vunpack.c.0.s8 %v1671
        %v1673 = vlaneseq
        %v1674 = vshrl.u32 %v1673, 7
        %v1675 = vsub.s32 %v1672, %v1674
        %v1676 = vrot.slane %v1666, %v1675
        %v1678 = vunpack.c.l.s4 1966171168
        %v1679 = vunpack.c.0.s8 %v1678
        %v1680 = vlaneseq
        %v1681 = vshrl.u32 %v1680, 7
        %v1682 = vsub.s32 %v1679, %v1681
        %v1683 = vrot.slane %v1667, %v1682
        %v1685 = vunpack.c.l.s4 1966171168
        %v1686 = vunpack.c.0.s8 %v1685
        %v1687 = vlaneseq
        %v1688 = vshrl.u32 %v1687, 7
        %v1689 = vsub.s32 %v1686, %v1688
        %v1690 = vrot.slane %v1668, %v1689
        %v1692 = vunpack.c.l.s4 1966171168
        %v1693 = vunpack.c.0.s8 %v1692
        %v1694 = vlaneseq
        %v1695 = vshrl.u32 %v1694, 7
        %v1696 = vsub.s32 %v1693, %v1695
        %v1697 = vrot.slane %v1669, %v1696
        %v1698 = vcombine.low %v1676, %v1683
        %v1699 = vcombine.low %v1690, %v1697
        %v1701 = vunpack.c.l.s4 1966171168
        %v1702 = vunpack.c.0.s8 %v1701
        %v1703 = vlaneseq
        %v1704 = vshrl.u32 %v1703, 7
        %v1705 = vsub.s32 %v1702, %v1704
        %v1706 = vrot.slane %v1698, %v1705
        %v1708 = vunpack.c.l.s4 1966171168
        %v1709 = vunpack.c.0.s8 %v1708
        %v1710 = vlaneseq
        %v1711 = vshrl.u32 %v1710, 7
        %v1712 = vsub.s32 %v1709, %v1711
        %v1713 = vrot.slane %v1699, %v1712
        %v1714 = vcombine.low %v1706, %v1713
        %1715 = vset.pattern.permute.xlu0 0
        %1716 = vperm.xlu0 %1715, %v1371
        %v1717 = vpop.permute.xlu0 %1716
        %1718 = vset.pattern.permute.xlu0 0
        %1719 = vperm.xlu0 %1718, %v1420
        %v1720 = vpop.permute.xlu0 %1719
        %1721 = vset.pattern.permute.xlu0 0
        %1722 = vperm.xlu0 %1721, %v1469
        %v1723 = vpop.permute.xlu0 %1722
        %1724 = vset.pattern.permute.xlu0 0
        %1725 = vperm.xlu0 %1724, %v1518
        %v1726 = vpop.permute.xlu0 %1725
        %1727 = vset.pattern.permute.xlu0 0
        %1728 = vperm.xlu0 %1727, %v1567
        %v1729 = vpop.permute.xlu0 %1728
        %1730 = vset.pattern.permute.xlu0 0
        %1731 = vperm.xlu0 %1730, %v1616
        %v1732 = vpop.permute.xlu0 %1731
        %1733 = vset.pattern.permute.xlu0 0
        %1734 = vperm.xlu0 %1733, %v1665
        %v1735 = vpop.permute.xlu0 %1734
        %1736 = vset.pattern.permute.xlu0 0
        %1737 = vperm.xlu0 %1736, %v1714
        %v1738 = vpop.permute.xlu0 %1737
        %v1739 = vlaneseq
        %v1740 = vshrl.u32 %v1739, 7
        %v1741 = vsub.s32 %v970, %v1740
        %v1742 = vrot.slane %v1717, %v1741
        %v1743 = vlaneseq
        %v1744 = vshrl.u32 %v1743, 7
        %v1745 = vsub.s32 %v975, %v1744
        %v1746 = vrot.slane %v1720, %v1745
        %v1747 = vsel %vm980, %v1746, %v1742
        %v1748 = vlaneseq
        %v1749 = vshrl.u32 %v1748, 7
        %v1750 = vsub.s32 %v982, %v1749
        %v1751 = vrot.slane %v1723, %v1750
        %v1752 = vsel %vm987, %v1751, %v1747
        %v1753 = vlaneseq
        %v1754 = vshrl.u32 %v1753, 7
        %v1755 = vsub.s32 %v989, %v1754
        %v1756 = vrot.slane %v1726, %v1755
        %v1757 = vsel %vm994, %v1756, %v1752
        %v1758 = vlaneseq
        %v1759 = vshrl.u32 %v1758, 7
        %v1760 = vsub.s32 %v996, %v1759
        %v1761 = vrot.slane %v1729, %v1760
        %v1762 = vsel %vm1001, %v1761, %v1757
        %v1763 = vlaneseq
        %v1764 = vshrl.u32 %v1763, 7
        %v1765 = vsub.s32 %v1003, %v1764
        %v1766 = vrot.slane %v1732, %v1765
        %v1767 = vsel %vm1008, %v1766, %v1762
        %v1768 = vlaneseq
        %v1769 = vshrl.u32 %v1768, 7
        %v1770 = vsub.s32 %v1010, %v1769
        %v1771 = vrot.slane %v1735, %v1770
        %v1772 = vsel %vm1015, %v1771, %v1767
        %v1773 = vlaneseq
        %v1774 = vshrl.u32 %v1773, 7
        %v1775 = vsub.s32 %v1017, %v1774
        %v1776 = vrot.slane %v1738, %v1775
        %v1777 = vsel %vm1022, %v1776, %v1772
        %v1779 = vunpack.c.l.s4 1966171168
        %v1780 = vunpack.c.0.s8 %v1779
        %v1781 = vlaneseq
        %v1782 = vshrl.u32 %v1781, 7
        %v1783 = vsub.s32 %v1780, %v1782
        %v1784 = vrot.slane %v1777, %v1783
        %v1786 = vunpack.c.l.s4 1966171168
        %v1787 = vunpack.c.0.s8 %v1786
        %v1788 = vlaneseq
        %v1789 = vshrl.u32 %v1788, 7
        %v1790 = vsub.s32 %v1787, %v1789
        %v1791 = vrot.slane %v1784, %v1790
        %v1793 = vmax.f32 %v1042, %v1791
        %1794 = vst.msk [vmem:[#allocation3] sm:$0x1] %vm1040, %v1793
        %p1795 = scmp.eq.s32.totalorder %s27, 1
        // Predicated region
        $region49: #{tpu_custom_call.1} parent=39 // pred_check
          %p1796 = pneg %p1795
        $region50: #{tpu_custom_call.1} parent=39 // pred_check_branch
          %1798 = sbr.rel (%p1796) target = $region52
        $region51: #{tpu_custom_call.1} parent=39 // pred_region
          %v1799 = vld [vmem:[#allocation2] sm:$0x1]
          %v1800 = vmul.f32 %v1799, 0.00390625
          %v1801 = vld [vmem:[#allocation3] sm:$0x1]
          %v1803 = vlaneseq
          %v1804 = vshrl.u32 %v1803, 7
          %v1805 = vsub.s32 0, %v1804
          %v1806 = vrot.slane %v1801, %v1805
          %vm1808 = vcmask 1040384
          %v1809 = vsel %vm1808, %v1800, %v1806
          %v1810 = vld [vmem:[%s1] sm:$0xff]
          %v1811 = vld [vmem:[%s1 + $0x8] sm:$0xff]
          %v1812 = vld [vmem:[%s1 + $0x10] sm:$0xff]
          %v1813 = vld [vmem:[%s1 + $0x18] sm:$0xff]
          %v1814 = vld [vmem:[%s1 + $0x20] sm:$0xff]
          %v1815 = vld [vmem:[%s1 + $0x28] sm:$0xff]
          %v1816 = vld [vmem:[%s1 + $0x30] sm:$0xff]
          %v1817 = vld [vmem:[%s1 + $0x38] sm:$0xff]
          %v1818 = vld [vmem:[%s2] sm:$0x1]
          %v1819 = vld [vmem:[%s3] sm:$0xf]
          %v1820 = vld [vmem:[%s4] sm:$0x1]
          %v1822 = vlaneseq
          %v1823 = vshrl.u32 %v1822, 7
          %v1824 = vsub.s32 0, %v1823
          %v1825 = vrot.slane %v1818, %v1824
          %vm1827 = vcmask 523264
          %v1829 = vsel %vm1827, %v1809, 0
          %1831 = vmatprep.subr.mxu0 0.0
          %1832 = vmatpush1.msra.mxu0 %v1810
          %1833 = vmatprep.subr.mxu0 0.0
          %1834 = vmatpush1.msra.mxu0 %v1811
          %1835 = vmatprep.subr.mxu0 0.0
          %1836 = vmatpush1.msra.mxu0 %v1812
          %1837 = vmatprep.subr.mxu0 0.0
          %1838 = vmatpush1.msra.mxu0 %v1813
          %1839 = vmatprep.subr.mxu0 0.0
          %1840 = vmatpush1.msra.mxu0 %v1814
          %1841 = vmatprep.subr.mxu0 0.0
          %1842 = vmatpush1.msra.mxu0 %v1815
          %1843 = vmatprep.subr.mxu0 0.0
          %1844 = vmatpush1.msra.mxu0 %v1816
          %1845 = vmatprep.subr.mxu0 0.0
          %1846 = vmatpush1.msra.mxu0 %v1817
          %1847 = vmatprep.subr.mxu0 0.0
          %1848 = vmatpush1.msra.mxu0 0.0
          %1849 = vmatprep.subr.mxu0 0.0
          %1850 = vmatpush1.msra.mxu0 0.0
          %1851 = vmatprep.subr.mxu0 0.0
          %1852 = vmatpush1.msra.mxu0 0.0
          %1853 = vmatprep.subr.mxu0 0.0
          %1854 = vmatpush1.msra.mxu0 0.0
          %1855 = vmatprep.subr.mxu0 0.0
          %1856 = vmatpush1.msra.mxu0 0.0
          %1857 = vmatprep.subr.mxu0 0.0
          %1858 = vmatpush1.msra.mxu0 0.0
          %1859 = vmatprep.subr.mxu0 0.0
          %1860 = vmatpush1.msra.mxu0 0.0
          %1861 = vmatprep.subr.mxu0 0.0
          %1862 = vmatpush1.msra.mxu0 0.0
          %1863 = vmatprep.subr.mxu0 0.0
          %1864 = vmatpush1.msra.mxu0 0.0
          %1865 = vmatprep.subr.mxu0 0.0
          %1866 = vmatpush1.msra.mxu0 0.0
          %1867 = vmatprep.subr.mxu0 0.0
          %1868 = vmatpush1.msra.mxu0 0.0
          %1869 = vmatprep.subr.mxu0 0.0
          %1870 = vmatpush1.msra.mxu0 0.0
          %1871 = vmatprep.subr.mxu0 0.0
          %1872 = vmatpush1.msra.mxu0 0.0
          %1873 = vmatprep.subr.mxu0 0.0
          %1874 = vmatpush1.msra.mxu0 0.0
          %1875 = vmatprep.subr.mxu0 0.0
          %1876 = vmatpush1.msra.mxu0 0.0
          %1877 = vmatprep.subr.mxu0 0.0
          %1878 = vmatpush1.msra.mxu0 0.0
          %1879 = vmatprep.subr.mxu0 0.0
          %1880 = vmatpush1.msra.mxu0 0.0
          %1881 = vmatprep.subr.mxu0 0.0
          %1882 = vmatpush1.msra.mxu0 0.0
          %1883 = vmatprep.subr.mxu0 0.0
          %1884 = vmatpush1.msra.mxu0 0.0
          %1885 = vmatprep.subr.mxu0 0.0
          %1886 = vmatpush1.msra.mxu0 0.0
          %1887 = vmatprep.subr.mxu0 0.0
          %1888 = vmatpush1.msra.mxu0 0.0
          %1889 = vmatprep.subr.mxu0 0.0
          %1890 = vmatpush1.msra.mxu0 0.0
          %1891 = vmatprep.subr.mxu0 0.0
          %1892 = vmatpush1.msra.mxu0 0.0
          %1893 = vmatprep.subr.mxu0 0.0
          %1894 = vmatpush1.msra.mxu0 0.0
          %1895 = vmatprep.mubr.f32.mxu0 0.0
          %1896 = vmatmul.mubr.f32.gmra.mrb[0].mxu0 %v1829
          %v1897 = vpop.f32.mrb[0].mxu0
          %v1898 = vadd.f32 %v1825, %v1897
          %v1899 = vpop.f32.mrb[0].mxu0
          %1900 = vdwg.mxu0
          %v1901 = vmax.f32 %v1898, 0.0
          %v1903 = vlaneseq
          %v1904 = vshrl.u32 %v1903, 7
          %v1905 = vsub.s32 0, %v1904
          %v1906 = vrot.slane %v1820, %v1905
          %vm1908 = vcmask 31744
          %v1910 = vsel %vm1908, %v1901, 0
          %vm1912 = vcmask 1043456
          %v1914 = vsel %vm1912, %v1819, 0
          %1916 = vmatprep.subr.mxu0 0.0
          %1917 = vmatpush1.msra.mxu0 %v1914
          %1918 = vmatprep.subr.mxu0 0.0
          %1919 = vmatpush1.msra.mxu0 0.0
          %1920 = vmatprep.subr.mxu0 0.0
          %1921 = vmatpush1.msra.mxu0 0.0
          %1922 = vmatprep.subr.mxu0 0.0
          %1923 = vmatpush1.msra.mxu0 0.0
          %1924 = vmatprep.subr.mxu0 0.0
          %1925 = vmatpush1.msra.mxu0 0.0
          %1926 = vmatprep.subr.mxu0 0.0
          %1927 = vmatpush1.msra.mxu0 0.0
          %1928 = vmatprep.subr.mxu0 0.0
          %1929 = vmatpush1.msra.mxu0 0.0
          %1930 = vmatprep.subr.mxu0 0.0
          %1931 = vmatpush1.msra.mxu0 0.0
          %1932 = vmatprep.subr.mxu0 0.0
          %1933 = vmatpush1.msra.mxu0 0.0
          %1934 = vmatprep.subr.mxu0 0.0
          %1935 = vmatpush1.msra.mxu0 0.0
          %1936 = vmatprep.subr.mxu0 0.0
          %1937 = vmatpush1.msra.mxu0 0.0
          %1938 = vmatprep.subr.mxu0 0.0
          %1939 = vmatpush1.msra.mxu0 0.0
          %1940 = vmatprep.subr.mxu0 0.0
          %1941 = vmatpush1.msra.mxu0 0.0
          %1942 = vmatprep.subr.mxu0 0.0
          %1943 = vmatpush1.msra.mxu0 0.0
          %1944 = vmatprep.subr.mxu0 0.0
          %1945 = vmatpush1.msra.mxu0 0.0
          %1946 = vmatprep.subr.mxu0 0.0
          %1947 = vmatpush1.msra.mxu0 0.0
          %1948 = vmatprep.subr.mxu0 0.0
          %1949 = vmatpush1.msra.mxu0 0.0
          %1950 = vmatprep.subr.mxu0 0.0
          %1951 = vmatpush1.msra.mxu0 0.0
          %1952 = vmatprep.subr.mxu0 0.0
          %1953 = vmatpush1.msra.mxu0 0.0
          %1954 = vmatprep.subr.mxu0 0.0
          %1955 = vmatpush1.msra.mxu0 0.0
          %1956 = vmatprep.subr.mxu0 0.0
          %1957 = vmatpush1.msra.mxu0 0.0
          %1958 = vmatprep.subr.mxu0 0.0
          %1959 = vmatpush1.msra.mxu0 0.0
          %1960 = vmatprep.subr.mxu0 0.0
          %1961 = vmatpush1.msra.mxu0 0.0
          %1962 = vmatprep.subr.mxu0 0.0
          %1963 = vmatpush1.msra.mxu0 0.0
          %1964 = vmatprep.subr.mxu0 0.0
          %1965 = vmatpush1.msra.mxu0 0.0
          %1966 = vmatprep.subr.mxu0 0.0
          %1967 = vmatpush1.msra.mxu0 0.0
          %1968 = vmatprep.subr.mxu0 0.0
          %1969 = vmatpush1.msra.mxu0 0.0
          %1970 = vmatprep.subr.mxu0 0.0
          %1971 = vmatpush1.msra.mxu0 0.0
          %1972 = vmatprep.subr.mxu0 0.0
          %1973 = vmatpush1.msra.mxu0 0.0
          %1974 = vmatprep.subr.mxu0 0.0
          %1975 = vmatpush1.msra.mxu0 0.0
          %1976 = vmatprep.subr.mxu0 0.0
          %1977 = vmatpush1.msra.mxu0 0.0
          %1978 = vmatprep.subr.mxu0 0.0
          %1979 = vmatpush1.msra.mxu0 0.0
          %1980 = vmatprep.mubr.f32.mxu0 0.0
          %1981 = vmatmul.mubr.f32.gmra.mrb[0].mxu0 %v1910
          %v1982 = vpop.f32.mrb[0].mxu0
          %v1983 = vadd.f32 %v1906, %v1982
          %v1984 = vpop.f32.mrb[0].mxu0
          %1985 = vdwg.mxu0
          %v1987 = vrot.slane %v1983, 1
          %v1989 = vadd.f32 %v1983, %v1987
          %v1990 = vxor.u32 %v1989, 2147483648
          %v1991 = vmul.f32 %v1990, 1.442695
          %v1992 = vpow.pop %v1991
          %v1993 = vadd.f32 %v1992, 1.0
          %v1994 = vrcp.pop %v1993
          %v1995 = vmul.f32 1.0, %v1994
          %1996 = vst.msk [vmem:[%s256] sm:$0x1] %vm1040, %v1995
        $region52: #{tpu_custom_call.1} parent=39 // pred_fallthru
          _
        %s1997 = sand.u32 %s154, 1
        %s1998 = scalar_lea.sflag [#allocation6], %s1997
        %s1999 = sand.u32 %s154, 1
        %s2000 = scalar_lea.vmem [#allocation7], %s1999
        // Predicated region
        $region53: #{tpu_custom_call.1} parent=39 // pred_check
          %p2001 = pneg %p164
        $region54: #{tpu_custom_call.1} parent=39 // pred_check_branch
          %2003 = sbr.rel (%p2001) target = $region56
        $region55: #{tpu_custom_call.1} parent=39 // pred_region
          %s2005 = ssub.s32 16, 16
          %2006 = vsyncadd %s1998, %s2005
          %s2007 = smul.addr %s26, 16
          %s2008 = scalar_lea.hbm %s5, %s2007
          %s2010 = sshll.u32 %s2000, 4
          %s2011 = int_to_ptr.vmem [resolvable:$true] %s2010
          %2013 = dma.vmem_to_hbm [thread:$0]  %s2011, 16, %s2008, %s1998
        $region56: #{tpu_custom_call.1} parent=39 // pred_fallthru
          _
      $region40: #{tpu_custom_call.1} parent=5 // pred_fallthru
        _
      %p2014 = scmp.le.s32.totalorder 2, %s17
      // Predicated region
      $region57: #{tpu_custom_call.1} parent=5 // pred_check
        %p2015 = pneg %p2014
      $region58: #{tpu_custom_call.1} parent=5 // pred_check_branch
        %2017 = sbr.rel (%p2015) target = $region60
      $region59: #{tpu_custom_call.1} parent=5 // pred_region
        %s2018 = ssub.s32 %s17, 2
        // Predicated region
        $region61: #{tpu_custom_call.1} parent=59 // pred_check
          %p2019 = pneg %p170
        $region62: #{tpu_custom_call.1} parent=59 // pred_check_branch
          %2021 = sbr.rel (%p2019) target = $region64
        $region63: #{tpu_custom_call.1} parent=59 // pred_region
          %s2022 = sand.u32 %s155, 1
          %s2023 = scalar_lea.sflag [#allocation6], %s2022
          %s2024 = sand.u32 %s155, 1
          %s2025 = scalar_lea.vmem [#allocation7], %s2024
          %2026 = dma.done %s2023, 16
        $region64: #{tpu_custom_call.1} parent=59 // pred_fallthru
          _
      $region60: #{tpu_custom_call.1} parent=5 // pred_fallthru
        _
    $region6: #{tpu_custom_call.1} parent=1 // loop_footer
      %s21 = sadd.s32 1, %s17
    $region7: #{tpu_custom_call.1} parent=1 // loop_footer_branch
      %16 = sbr.rel target = $region3
    $region8: #{tpu_custom_call.1} parent=1 // loop_exit
      _
    %2027 = vsyncpa [#allocation5], 1
    %s2028 = scalar_lea.sflag [#allocation5], 1
    %2029 = vsyncpa %s2028, 1
    %2030 = vsyncpa [#allocation6], 1
    %s2031 = scalar_lea.sflag [#allocation6], 1
    %2032 = vsyncpa %s2031, 1

</llo_original>
